<compile_context>
chip_gen: v5e
topology: v5e:2x2
jax: 0.10.0
libtpu: 0.0.40
codegen_flags: <defaults>
</compile_context>

<pallas_src>
import math

import jax
import jax.numpy as jnp
from jax.experimental import pallas as pl
from jax.experimental.pallas import tpu as pltpu

BATCH = 8
BRANCH_DIMS = (1024, 881, 780, 1024)   # fp, fp1, fp3, fp4 input feature dims
NUM_BRANCHES = len(BRANCH_DIMS)
KMAX = 1024                            # shared (padded) input-feature dim
H1, H2, H3 = 512, 256, 128
BN_EPS = 1e-5


# ---------------------------------------------------------------------------
# Fused kernel: one grid step = one branch, all three Linear+BN+ReLU layers.
# Intermediates (8,512) / (8,256) stay in vregs/VMEM; only (8,128) goes to HBM.
# ---------------------------------------------------------------------------
def _fp_branch_kernel(x_ref, w1_ref, b1_ref, w2_ref, b2_ref, w3_ref, b3_ref,
                      o_ref):
    x = x_ref[0]                                                  # (B, KMAX)
    h = jnp.dot(x, w1_ref[0], preferred_element_type=jnp.float32) + b1_ref[0]
    h = jnp.maximum(h, 0.0)                                       # (B, 512)
    h = jnp.dot(h, w2_ref[0], preferred_element_type=jnp.float32) + b2_ref[0]
    h = jnp.maximum(h, 0.0)                                       # (B, 256)
    h = jnp.dot(h, w3_ref[0], preferred_element_type=jnp.float32) + b3_ref[0]
    h = jnp.maximum(h, 0.0)                                       # (B, 128)
    o_ref[0] = h.astype(o_ref.dtype)


def fp_model_forward(params, x, x1, x3, x4):
    # Zero-pad the narrower branches up to KMAX and stack -> (4, B, KMAX).
    # (Padded weight rows are zero, so padded input columns contribute nothing.)
    def padk(a):
        return jnp.pad(a, ((0, 0), (0, KMAX - a.shape[1])))

    xs = jnp.stack([padk(x), padk(x1), padk(x3), padk(x4)], axis=0)

    out = pl.pallas_call(
        _fp_branch_kernel,
        out_shape=jax.ShapeDtypeStruct((NUM_BRANCHES, BATCH, H3), jnp.float32),
        grid_spec=pltpu.PrefetchScalarGridSpec(
            num_scalar_prefetch=0,
            grid=(NUM_BRANCHES,),
            in_specs=[
                pl.BlockSpec((1, BATCH, KMAX), lambda i: (i, 0, 0)),
                pl.BlockSpec((1, KMAX, H1), lambda i: (i, 0, 0)),
                pl.BlockSpec((1, 1, H1), lambda i: (i, 0, 0)),
                pl.BlockSpec((1, H1, H2), lambda i: (i, 0, 0)),
                pl.BlockSpec((1, 1, H2), lambda i: (i, 0, 0)),
                pl.BlockSpec((1, H2, H3), lambda i: (i, 0, 0)),
                pl.BlockSpec((1, 1, H3), lambda i: (i, 0, 0)),
            ],
            out_specs=pl.BlockSpec((1, BATCH, H3), lambda i: (i, 0, 0)),
        ),
        compiler_params=pltpu.CompilerParams(
            # Branch axis is independent -> v7x megacore splits it 2/2.
            dimension_semantics=("parallel",)),
    )(xs, params["w1"], params["b1"], params["w2"], params["b2"],
      params["w3"], params["b3"])

    return out[0], out[1], out[2], out[3]


# ---------------------------------------------------------------------------
# Deterministic parameter construction (PyTorch-like uniform init, BN folded,
# pre-padded and pre-stacked ONCE, outside the jitted forward).
# ---------------------------------------------------------------------------
def _init_linear(key, fan_in, fan_out):
    kw, kb = jax.random.split(key)
    bound = 1.0 / math.sqrt(fan_in)
    w = jax.random.uniform(kw, (fan_in, fan_out), jnp.float32, -bound, bound)
    b = jax.random.uniform(kb, (fan_out,), jnp.float32, -bound, bound)
    return w, b


def _fold_bn(w, b):
    # eval-mode BatchNorm1d: gamma=1, beta=0, running_mean=0, running_var=1.
    scale = 1.0 / math.sqrt(1.0 + BN_EPS)
    return w * scale, b * scale


def make_params(key):
    keys = jax.random.split(key, NUM_BRANCHES * 3 + 1)
    w1s, b1s, w2s, b2s, w3s, b3s = [], [], [], [], [], []
    for br, k_in in enumerate(BRANCH_DIMS):
        k1, k2, k3 = keys[3 * br], keys[3 * br + 1], keys[3 * br + 2]
        w1, b1 = _fold_bn(*_init_linear(k1, k_in, H1))
        w2, b2 = _fold_bn(*_init_linear(k2, H1, H2))
        w3, b3 = _fold_bn(*_init_linear(k3, H2, H3))
        # Zero-pad first-layer weight along K to the shared KMAX.
        w1 = jnp.pad(w1, ((0, KMAX - k_in), (0, 0)))
        w1s.append(w1); b1s.append(b1.reshape(1, H1))
        w2s.append(w2); b2s.append(b2.reshape(1, H2))
        w3s.append(w3); b3s.append(b3.reshape(1, H3))

    # fc (128 -> 1) exists in the module but is unused by FpModel.forward().
    fc_w, fc_b = _init_linear(keys[-1], H3, 1)

    return {
        "w1": jnp.stack(w1s), "b1": jnp.stack(b1s),
        "w2": jnp.stack(w2s), "b2": jnp.stack(b2s),
        "w3": jnp.stack(w3s), "b3": jnp.stack(b3s),
        "fc_w": fc_w, "fc_b": fc_b,   # unused in forward (matches reference)
    }


@jax.jit
def model_forward(params, x, x1, x3, x4):
    return fp_model_forward(params, x, x1, x3, x4)


if __name__ == "__main__":
    key = jax.random.PRNGKey(0)
    kp, kx, kx1, kx3, kx4 = jax.random.split(key, 5)

    params = make_params(kp)

    x = jax.random.normal(kx, (BATCH, 1024), jnp.float32)
    x1 = jax.random.normal(kx1, (BATCH, 881), jnp.float32)
    x3 = jax.random.normal(kx3, (BATCH, 780), jnp.float32)
    x4 = jax.random.normal(kx4, (BATCH, 1024), jnp.float32)

    o, o1, o3, o4 = model_forward(params, x, x1, x3, x4)
    jax.block_until_ready((o, o1, o3, o4))

    assert o.shape == (BATCH, H3) and o1.shape == (BATCH, H3)
    assert o3.shape == (BATCH, H3) and o4.shape == (BATCH, H3)
    assert all(bool(jnp.all(t >= 0.0)) for t in (o, o1, o3, o4))  # ReLU outputs
    print("KERNEL_OK")
</pallas_src>

<mosaic_0001>
module attributes {stable_mosaic.version = 11 : i64} {
  func.func @_fp_branch_kernel(%arg0: i32, %arg1: memref<1x8x1024xf32, #tpu.memory_space<vmem>>, %arg2: memref<1x1024x512xf32, #tpu.memory_space<vmem>>, %arg3: memref<1x1x512xf32, #tpu.memory_space<vmem>>, %arg4: memref<1x512x256xf32, #tpu.memory_space<vmem>>, %arg5: memref<1x1x256xf32, #tpu.memory_space<vmem>>, %arg6: memref<1x256x128xf32, #tpu.memory_space<vmem>>, %arg7: memref<1x1x128xf32, #tpu.memory_space<vmem>>, %arg8: memref<1x8x128xf32, #tpu.memory_space<vmem>>) attributes {dimension_semantics = [#tpu.dimension_semantics<parallel>], iteration_bounds = array<i64: 4>, scalar_prefetch = 0 : i64, scratch_operands = 0 : i64, tpu.core_type = #tpu.core_type<tc>, window_params = [{transform_indices = @transform_0, window_bounds = array<i64: 1, 8, 1024>}, {transform_indices = @transform_1, window_bounds = array<i64: 1, 1024, 512>}, {transform_indices = @transform_2, window_bounds = array<i64: 1, 1, 512>}, {transform_indices = @transform_3, window_bounds = array<i64: 1, 512, 256>}, {transform_indices = @transform_4, window_bounds = array<i64: 1, 1, 256>}, {transform_indices = @transform_5, window_bounds = array<i64: 1, 256, 128>}, {transform_indices = @transform_6, window_bounds = array<i64: 1, 1, 128>}, {transform_indices = @transform_7, window_bounds = array<i64: 1, 8, 128>}]} {
    %c0 = arith.constant 0 : index
    %c0_0 = arith.constant 0 : index
    %c0_1 = arith.constant 0 : index
    %0 = vector.load %arg1[%c0, %c0_0, %c0_1] : memref<1x8x1024xf32, #tpu.memory_space<vmem>>, vector<1x8x1024xf32>
    %1 = vector.shape_cast %0 : vector<1x8x1024xf32> to vector<8x1024xf32>
    %c0_2 = arith.constant 0 : index
    %c0_3 = arith.constant 0 : index
    %c0_4 = arith.constant 0 : index
    %2 = vector.load %arg2[%c0_2, %c0_3, %c0_4] : memref<1x1024x512xf32, #tpu.memory_space<vmem>>, vector<1x1024x512xf32>
    %3 = vector.shape_cast %2 : vector<1x1024x512xf32> to vector<1024x512xf32>
    %cst = arith.constant dense<0.000000e+00> : vector<8x512xf32>
    %4 = tpu.matmul %1, %3, %cst {dimension_numbers = #tpu.dot_dimension_numbers<[1], [0], [0], [1], [0, 0, 1, 1], [], []>} : vector<8x1024xf32>, vector<1024x512xf32>, vector<8x512xf32> -> vector<8x512xf32>
    %c0_5 = arith.constant 0 : index
    %c0_6 = arith.constant 0 : index
    %c0_7 = arith.constant 0 : index
    %5 = vector.load %arg3[%c0_5, %c0_6, %c0_7] : memref<1x1x512xf32, #tpu.memory_space<vmem>>, vector<1x1x512xf32>
    %6 = vector.shape_cast %5 : vector<1x1x512xf32> to vector<1x512xf32>
    %7 = vector.broadcast %6 : vector<1x512xf32> to vector<8x512xf32>
    %8 = arith.addf %4, %7 : vector<8x512xf32>
    %cst_8 = arith.constant 0.000000e+00 : f32
    %9 = vector.broadcast %cst_8 : f32 to vector<8x512xf32>
    %10 = arith.maximumf %8, %9 : vector<8x512xf32>
    %c0_9 = arith.constant 0 : index
    %c0_10 = arith.constant 0 : index
    %c0_11 = arith.constant 0 : index
    %11 = vector.load %arg4[%c0_9, %c0_10, %c0_11] : memref<1x512x256xf32, #tpu.memory_space<vmem>>, vector<1x512x256xf32>
    %12 = vector.shape_cast %11 : vector<1x512x256xf32> to vector<512x256xf32>
    %cst_12 = arith.constant dense<0.000000e+00> : vector<8x256xf32>
    %13 = tpu.matmul %10, %12, %cst_12 {dimension_numbers = #tpu.dot_dimension_numbers<[1], [0], [0], [1], [0, 0, 1, 1], [], []>} : vector<8x512xf32>, vector<512x256xf32>, vector<8x256xf32> -> vector<8x256xf32>
    %c0_13 = arith.constant 0 : index
    %c0_14 = arith.constant 0 : index
    %c0_15 = arith.constant 0 : index
    %14 = vector.load %arg5[%c0_13, %c0_14, %c0_15] : memref<1x1x256xf32, #tpu.memory_space<vmem>>, vector<1x1x256xf32>
    %15 = vector.shape_cast %14 : vector<1x1x256xf32> to vector<1x256xf32>
    %16 = vector.broadcast %15 : vector<1x256xf32> to vector<8x256xf32>
    %17 = arith.addf %13, %16 : vector<8x256xf32>
    %cst_16 = arith.constant 0.000000e+00 : f32
    %18 = vector.broadcast %cst_16 : f32 to vector<8x256xf32>
    %19 = arith.maximumf %17, %18 : vector<8x256xf32>
    %c0_17 = arith.constant 0 : index
    %c0_18 = arith.constant 0 : index
    %c0_19 = arith.constant 0 : index
    %20 = vector.load %arg6[%c0_17, %c0_18, %c0_19] : memref<1x256x128xf32, #tpu.memory_space<vmem>>, vector<1x256x128xf32>
    %21 = vector.shape_cast %20 : vector<1x256x128xf32> to vector<256x128xf32>
    %cst_20 = arith.constant dense<0.000000e+00> : vector<8x128xf32>
    %22 = tpu.matmul %19, %21, %cst_20 {dimension_numbers = #tpu.dot_dimension_numbers<[1], [0], [0], [1], [0, 0, 1, 1], [], []>} : vector<8x256xf32>, vector<256x128xf32>, vector<8x128xf32> -> vector<8x128xf32>
    %c0_21 = arith.constant 0 : index
    %c0_22 = arith.constant 0 : index
    %c0_23 = arith.constant 0 : index
    %23 = vector.load %arg7[%c0_21, %c0_22, %c0_23] : memref<1x1x128xf32, #tpu.memory_space<vmem>>, vector<1x1x128xf32>
    %24 = vector.shape_cast %23 : vector<1x1x128xf32> to vector<1x128xf32>
    %25 = vector.broadcast %24 : vector<1x128xf32> to vector<8x128xf32>
    %26 = arith.addf %22, %25 : vector<8x128xf32>
    %cst_24 = arith.constant 0.000000e+00 : f32
    %27 = vector.broadcast %cst_24 : f32 to vector<8x128xf32>
    %28 = arith.maximumf %26, %27 : vector<8x128xf32>
    %c0_25 = arith.constant 0 : index
    %c0_26 = arith.constant 0 : index
    %c0_27 = arith.constant 0 : index
    %29 = vector.load %arg8[%c0_25, %c0_26, %c0_27] : memref<1x8x128xf32, #tpu.memory_space<vmem>>, vector<1x8x128xf32>
    %30 = vector.shape_cast %29 : vector<1x8x128xf32> to vector<8x128xf32>
    %31 = vector.shape_cast %28 : vector<8x128xf32> to vector<1x8x128xf32>
    tpu.vector_store %arg8[%c0_25, %c0_26, %c0_27], %31 {strides = array<i32>} : memref<1x8x128xf32, #tpu.memory_space<vmem>>, vector<1x8x128xf32>,
    return
  }
  func.func @transform_0(%arg0: i32) -> (i32, i32, i32) {
    %c0_i32 = arith.constant 0 : i32
    %c0_i32_0 = arith.constant 0 : i32
    %c0_i32_1 = arith.constant 0 : i32
    return %arg0, %c0_i32, %c0_i32_0 : i32, i32, i32
  }
  func.func @transform_1(%arg0: i32) -> (i32, i32, i32) {
    %c0_i32 = arith.constant 0 : i32
    %c0_i32_0 = arith.constant 0 : i32
    %c0_i32_1 = arith.constant 0 : i32
    return %arg0, %c0_i32, %c0_i32_0 : i32, i32, i32
  }
  func.func @transform_2(%arg0: i32) -> (i32, i32, i32) {
    %c0_i32 = arith.constant 0 : i32
    %c0_i32_0 = arith.constant 0 : i32
    %c0_i32_1 = arith.constant 0 : i32
    return %arg0, %c0_i32, %c0_i32_0 : i32, i32, i32
  }
  func.func @transform_3(%arg0: i32) -> (i32, i32, i32) {
    %c0_i32 = arith.constant 0 : i32
    %c0_i32_0 = arith.constant 0 : i32
    %c0_i32_1 = arith.constant 0 : i32
    return %arg0, %c0_i32, %c0_i32_0 : i32, i32, i32
  }
  func.func @transform_4(%arg0: i32) -> (i32, i32, i32) {
    %c0_i32 = arith.constant 0 : i32
    %c0_i32_0 = arith.constant 0 : i32
    %c0_i32_1 = arith.constant 0 : i32
    return %arg0, %c0_i32, %c0_i32_0 : i32, i32, i32
  }
  func.func @transform_5(%arg0: i32) -> (i32, i32, i32) {
    %c0_i32 = arith.constant 0 : i32
    %c0_i32_0 = arith.constant 0 : i32
    %c0_i32_1 = arith.constant 0 : i32
    return %arg0, %c0_i32, %c0_i32_0 : i32, i32, i32
  }
  func.func @transform_6(%arg0: i32) -> (i32, i32, i32) {
    %c0_i32 = arith.constant 0 : i32
    %c0_i32_0 = arith.constant 0 : i32
    %c0_i32_1 = arith.constant 0 : i32
    return %arg0, %c0_i32, %c0_i32_0 : i32, i32, i32
  }
  func.func @transform_7(%arg0: i32) -> (i32, i32, i32) {
    %c0_i32 = arith.constant 0 : i32
    %c0_i32_0 = arith.constant 0 : i32
    %c0_i32_1 = arith.constant 0 : i32
    return %arg0, %c0_i32, %c0_i32_0 : i32, i32, i32
  }
}

</mosaic_0001>

<llo_original>
// kernel: model_forward.1
$region0: #{model_forward.1}
  #allocation0 [shape = 'u32[]', space=smem, size = 0x4, offset = 0x4, fixed_abs, tag = 'smem constant byte address 0x4 - core index']
  #allocation1 [shape = 'u32[72,128]{1,0:T(1,128)}', space=vmem, size = 0x9000, scoped, tag = 'internal scratch']
  %s0 = inlined_call_operand.vmem [shape: f32[4,8,1024], index: 0, kind: input, shape index: {}]
  %s1 = inlined_call_operand.hbm [shape: f32[4,1024,512], index: 1, kind: input, shape index: {}]
  %s2 = inlined_call_operand.hbm [shape: f32[4,1,512], index: 2, kind: input, shape index: {}]
  %s3 = inlined_call_operand.hbm [shape: f32[4,512,256], index: 3, kind: input, shape index: {}]
  %s4 = inlined_call_operand.hbm [shape: f32[4,1,256], index: 4, kind: input, shape index: {}]
  %s5 = inlined_call_operand.hbm [shape: f32[4,256,128], index: 5, kind: input, shape index: {}]
  %s6 = inlined_call_operand.hbm [shape: f32[4,1,128], index: 6, kind: input, shape index: {}]
  %s7 = inlined_call_operand.vmem [shape: f32[4,8,128], index: 7, kind: output, shape index: {}]
  %s8 = sld [smem:[#allocation0]]
  $region85: #{model_forward.1} parent=0
    _
  %s10 = ssub.s32 1, %s8
  %s11 = scalar_select 0, %s10, %s8
  $region1: #{model_forward.1} parent=0
    #allocation2 [shape = 'u8[4194304]{0}', space=vmem, size = 0x400000, scoped, tag = 'input window, operand 1']
    #allocation3 [shape = 's32[2]{0}', space=sflag, size = 0x8, scoped, tag = 'scoped memory for model_forward.1']
    #allocation4 [shape = 'u8[4096]{0}', space=vmem, size = 0x1000, scoped, tag = 'input window, operand 2']
    #allocation5 [shape = 's32[2]{0}', space=sflag, size = 0x8, scoped, tag = 'scoped memory for model_forward.1']
    #allocation6 [shape = 'u8[1048576]{0}', space=vmem, size = 0x100000, scoped, tag = 'input window, operand 3']
    #allocation7 [shape = 'u8[2048]{0}', space=vmem, size = 0x800, scoped, tag = 'input window, operand 4']
    #allocation8 [shape = 's32[2]{0}', space=sflag, size = 0x8, scoped, tag = 'scoped memory for model_forward.1']
    #allocation9 [shape = 'u8[262144]{0}', space=vmem, size = 0x40000, scoped, tag = 'input window, operand 5']
    #allocation10 [shape = 'u8[1024]{0}', space=vmem, size = 0x400, scoped, tag = 'input window, operand 6']
    #allocation11 [shape = 's32[2]{0}', space=sflag, size = 0x8, scoped, tag = 'scoped memory for model_forward.1']
    %12 = vsyncpa [#allocation3], 0
    %s13 = scalar_lea.sflag [#allocation3], 1
    %14 = vsyncpa %s13, 0
    %15 = vsyncpa [#allocation5], 0
    %s16 = scalar_lea.sflag [#allocation5], 1
    %17 = vsyncpa %s16, 0
    %18 = vsyncpa [#allocation8], 0
    %s19 = scalar_lea.sflag [#allocation8], 1
    %20 = vsyncpa %s19, 0
    %21 = vsyncpa [#allocation11], 0
    %s22 = scalar_lea.sflag [#allocation11], 1
    %23 = vsyncpa %s22, 0
    loop: start=0, step=1, limit=6
    $region2: #{model_forward.1} parent=1 // loop_pre_header
      _
    $region3: #{model_forward.1} parent=1 // loop_header
      %s25 = sphi 0, %s29
      %p26 = scmp.ge.s32.totalorder %s25, 6
      %s35 = sphi 0, %s37
      %s38 = sphi 0, %s35
      %s39 = sphi 0, %s38
      %s55 = sphi 0, %s39
      %s61 = sphi 0, %s63
      %s64 = sphi 0, %s61
      %s65 = sphi 0, %s64
      %s81 = sphi 0, %s65
      %s87 = sphi 0, %s89
      %s90 = sphi 0, %s87
      %s91 = sphi 0, %s90
      %s107 = sphi 0, %s91
      %s113 = sphi 0, %s115
      %s116 = sphi 0, %s113
      %s117 = sphi 0, %s116
      %s133 = sphi 0, %s117
      %s139 = sphi 0, %s141
      %s142 = sphi 0, %s139
      %s143 = sphi 0, %s142
      %s159 = sphi 0, %s143
      %s165 = sphi 0, %s167
      %s168 = sphi 0, %s165
      %s169 = sphi 0, %s168
      %s185 = sphi 0, %s169
      %s191 = sphi 0, %s193
      %s194 = sphi 0, %s191
      %s195 = sphi 0, %s194
      %s211 = sphi 0, %s195
      %s217 = sphi 0, %s219
      %s220 = sphi 0, %s217
      %s221 = sphi 0, %s220
      %s237 = sphi 0, %s221
    $region4: #{model_forward.1} parent=1 // loop_header_branch
      %28 = sbr.rel (%p26) target = $region8
    $region5: #{model_forward.1} parent=1 // loop_body
      %s30 = ssub.s32 %s25, 1
      %s31 = ssub.s32 %s25, 2
      %s32 = sadd.s32 %s25, 1
      %s33 = ssub.s32 %s25, %s32
      %p34 = scmp.eq.s32.totalorder %s33, 0
      %s36 = sadd.s32 %s35, 1
      %s37 = scalar_select %p34, %s35, %s36
      %p40 = pneg %p34
      %p41 = scmp.eq.s32.totalorder %s25, 3
      %p42 = por %p40, %p41
      %p43 = scmp.ne.s32.totalorder %s35, %s38
      %p44 = scmp.eq.s32.totalorder %s25, 0
      %p45 = por %p43, %p44
      %p46 = scmp.ne.s32.totalorder %s35, %s38
      %p47 = scmp.eq.s32.totalorder %s30, 3
      %p48 = por %p46, %p47
      %p49 = scmp.ne.s32.totalorder %s38, %s39
      %p50 = scmp.eq.s32.totalorder %s30, 0
      %p51 = por %p49, %p50
      %p52 = scmp.ne.s32.totalorder %s38, %s39
      %p53 = scmp.eq.s32.totalorder %s31, 3
      %p54 = por %p52, %p53
      %p56 = scmp.ne.s32.totalorder %s39, %s55
      %p57 = scmp.eq.s32.totalorder %s31, 0
      %p58 = por %p56, %p57
      %s59 = ssub.s32 %s25, %s32
      %p60 = scmp.eq.s32.totalorder %s59, 0
      %s62 = sadd.s32 %s61, 1
      %s63 = scalar_select %p60, %s61, %s62
      %p66 = pneg %p60
      %p67 = scmp.eq.s32.totalorder %s25, 3
      %p68 = por %p66, %p67
      %p69 = scmp.ne.s32.totalorder %s61, %s64
      %p70 = scmp.eq.s32.totalorder %s25, 0
      %p71 = por %p69, %p70
      %p72 = scmp.ne.s32.totalorder %s61, %s64
      %p73 = scmp.eq.s32.totalorder %s30, 3
      %p74 = por %p72, %p73
      %p75 = scmp.ne.s32.totalorder %s64, %s65
      %p76 = scmp.eq.s32.totalorder %s30, 0
      %p77 = por %p75, %p76
      %p78 = scmp.ne.s32.totalorder %s64, %s65
      %p79 = scmp.eq.s32.totalorder %s31, 3
      %p80 = por %p78, %p79
      %p82 = scmp.ne.s32.totalorder %s65, %s81
      %p83 = scmp.eq.s32.totalorder %s31, 0
      %p84 = por %p82, %p83
      %s85 = ssub.s32 %s25, %s32
      %p86 = scmp.eq.s32.totalorder %s85, 0
      %s88 = sadd.s32 %s87, 1
      %s89 = scalar_select %p86, %s87, %s88
      %p92 = pneg %p86
      %p93 = scmp.eq.s32.totalorder %s25, 3
      %p94 = por %p92, %p93
      %p95 = scmp.ne.s32.totalorder %s87, %s90
      %p96 = scmp.eq.s32.totalorder %s25, 0
      %p97 = por %p95, %p96
      %p98 = scmp.ne.s32.totalorder %s87, %s90
      %p99 = scmp.eq.s32.totalorder %s30, 3
      %p100 = por %p98, %p99
      %p101 = scmp.ne.s32.totalorder %s90, %s91
      %p102 = scmp.eq.s32.totalorder %s30, 0
      %p103 = por %p101, %p102
      %p104 = scmp.ne.s32.totalorder %s90, %s91
      %p105 = scmp.eq.s32.totalorder %s31, 3
      %p106 = por %p104, %p105
      %p108 = scmp.ne.s32.totalorder %s91, %s107
      %p109 = scmp.eq.s32.totalorder %s31, 0
      %p110 = por %p108, %p109
      %s111 = ssub.s32 %s25, %s32
      %p112 = scmp.eq.s32.totalorder %s111, 0
      %s114 = sadd.s32 %s113, 1
      %s115 = scalar_select %p112, %s113, %s114
      %p118 = pneg %p112
      %p119 = scmp.eq.s32.totalorder %s25, 3
      %p120 = por %p118, %p119
      %p121 = scmp.ne.s32.totalorder %s113, %s116
      %p122 = scmp.eq.s32.totalorder %s25, 0
      %p123 = por %p121, %p122
      %p124 = scmp.ne.s32.totalorder %s113, %s116
      %p125 = scmp.eq.s32.totalorder %s30, 3
      %p126 = por %p124, %p125
      %p127 = scmp.ne.s32.totalorder %s116, %s117
      %p128 = scmp.eq.s32.totalorder %s30, 0
      %p129 = por %p127, %p128
      %p130 = scmp.ne.s32.totalorder %s116, %s117
      %p131 = scmp.eq.s32.totalorder %s31, 3
      %p132 = por %p130, %p131
      %p134 = scmp.ne.s32.totalorder %s117, %s133
      %p135 = scmp.eq.s32.totalorder %s31, 0
      %p136 = por %p134, %p135
      %s137 = ssub.s32 %s25, %s32
      %p138 = scmp.eq.s32.totalorder %s137, 0
      %s140 = sadd.s32 %s139, 1
      %s141 = scalar_select %p138, %s139, %s140
      %p144 = pneg %p138
      %p145 = scmp.eq.s32.totalorder %s25, 3
      %p146 = por %p144, %p145
      %p147 = scmp.ne.s32.totalorder %s139, %s142
      %p148 = scmp.eq.s32.totalorder %s25, 0
      %p149 = por %p147, %p148
      %p150 = scmp.ne.s32.totalorder %s139, %s142
      %p151 = scmp.eq.s32.totalorder %s30, 3
      %p152 = por %p150, %p151
      %p153 = scmp.ne.s32.totalorder %s142, %s143
      %p154 = scmp.eq.s32.totalorder %s30, 0
      %p155 = por %p153, %p154
      %p156 = scmp.ne.s32.totalorder %s142, %s143
      %p157 = scmp.eq.s32.totalorder %s31, 3
      %p158 = por %p156, %p157
      %p160 = scmp.ne.s32.totalorder %s143, %s159
      %p161 = scmp.eq.s32.totalorder %s31, 0
      %p162 = por %p160, %p161
      %s163 = ssub.s32 %s25, %s32
      %p164 = scmp.eq.s32.totalorder %s163, 0
      %s166 = sadd.s32 %s165, 1
      %s167 = scalar_select %p164, %s165, %s166
      %p170 = pneg %p164
      %p171 = scmp.eq.s32.totalorder %s25, 3
      %p172 = por %p170, %p171
      %p173 = scmp.ne.s32.totalorder %s165, %s168
      %p174 = scmp.eq.s32.totalorder %s25, 0
      %p175 = por %p173, %p174
      %p176 = scmp.ne.s32.totalorder %s165, %s168
      %p177 = scmp.eq.s32.totalorder %s30, 3
      %p178 = por %p176, %p177
      %p179 = scmp.ne.s32.totalorder %s168, %s169
      %p180 = scmp.eq.s32.totalorder %s30, 0
      %p181 = por %p179, %p180
      %p182 = scmp.ne.s32.totalorder %s168, %s169
      %p183 = scmp.eq.s32.totalorder %s31, 3
      %p184 = por %p182, %p183
      %p186 = scmp.ne.s32.totalorder %s169, %s185
      %p187 = scmp.eq.s32.totalorder %s31, 0
      %p188 = por %p186, %p187
      %s189 = ssub.s32 %s25, %s32
      %p190 = scmp.eq.s32.totalorder %s189, 0
      %s192 = sadd.s32 %s191, 1
      %s193 = scalar_select %p190, %s191, %s192
      %p196 = pneg %p190
      %p197 = scmp.eq.s32.totalorder %s25, 3
      %p198 = por %p196, %p197
      %p199 = scmp.ne.s32.totalorder %s191, %s194
      %p200 = scmp.eq.s32.totalorder %s25, 0
      %p201 = por %p199, %p200
      %p202 = scmp.ne.s32.totalorder %s191, %s194
      %p203 = scmp.eq.s32.totalorder %s30, 3
      %p204 = por %p202, %p203
      %p205 = scmp.ne.s32.totalorder %s194, %s195
      %p206 = scmp.eq.s32.totalorder %s30, 0
      %p207 = por %p205, %p206
      %p208 = scmp.ne.s32.totalorder %s194, %s195
      %p209 = scmp.eq.s32.totalorder %s31, 3
      %p210 = por %p208, %p209
      %p212 = scmp.ne.s32.totalorder %s195, %s211
      %p213 = scmp.eq.s32.totalorder %s31, 0
      %p214 = por %p212, %p213
      %s215 = ssub.s32 %s25, %s32
      %p216 = scmp.eq.s32.totalorder %s215, 0
      %s218 = sadd.s32 %s217, 1
      %s219 = scalar_select %p216, %s217, %s218
      %p222 = pneg %p216
      %p223 = scmp.eq.s32.totalorder %s25, 3
      %p224 = por %p222, %p223
      %p225 = scmp.ne.s32.totalorder %s217, %s220
      %p226 = scmp.eq.s32.totalorder %s25, 0
      %p227 = por %p225, %p226
      %p228 = scmp.ne.s32.totalorder %s217, %s220
      %p229 = scmp.eq.s32.totalorder %s30, 3
      %p230 = por %p228, %p229
      %p231 = scmp.ne.s32.totalorder %s220, %s221
      %p232 = scmp.eq.s32.totalorder %s30, 0
      %p233 = por %p231, %p232
      %p234 = scmp.ne.s32.totalorder %s220, %s221
      %p235 = scmp.eq.s32.totalorder %s31, 3
      %p236 = por %p234, %p235
      %p238 = scmp.ne.s32.totalorder %s221, %s237
      %p239 = scmp.eq.s32.totalorder %s31, 0
      %p240 = por %p238, %p239
      %p241 = scmp.le.s32.totalorder 1, %s25
      %p242 = scmp.lt.s32.totalorder %s25, 5
      %p243 = pnand %p241, %p242
      %p244 = pneg %p243
      // Predicated region
      $region9: #{model_forward.1} parent=5 // pred_check
        _
      $region10: #{model_forward.1} parent=5 // pred_check_branch
        %246 = sbr.rel (%p243) target = $region12
      $region11: #{model_forward.1} parent=5 // pred_region
        %s247 = ssub.s32 %s25, 1
      $region12: #{model_forward.1} parent=5 // pred_fallthru
        _
      %p248 = scmp.lt.s32.totalorder %s25, 4
      // Predicated region
      $region13: #{model_forward.1} parent=5 // pred_check
        %p249 = pneg %p248
      $region14: #{model_forward.1} parent=5 // pred_check_branch
        %251 = sbr.rel (%p249) target = $region16
      $region15: #{model_forward.1} parent=5 // pred_region
        // Predicated region
        $region17: #{model_forward.1} parent=15 // pred_check
          %p252 = pneg %p45
        $region18: #{model_forward.1} parent=15 // pred_check_branch
          %254 = sbr.rel (%p252) target = $region20
        $region19: #{model_forward.1} parent=15 // pred_region
          %p255 = scmp.lt.s32.totalorder %s25, 3
          %s256 = scalar_select %p255, %s25, 3
          %s257 = smul.addr %s256, 8
          %s258 = smul.addr %s257, 8
          %s259 = scalar_lea.vmem %s0, %s258
        $region20: #{model_forward.1} parent=15 // pred_fallthru
          _
        // Predicated region
        $region21: #{model_forward.1} parent=15 // pred_check
          %p260 = pneg %p71
        $region22: #{model_forward.1} parent=15 // pred_check_branch
          %262 = sbr.rel (%p260) target = $region24
        $region23: #{model_forward.1} parent=15 // pred_region
          %s263 = sand.u32 %s61, 1
          %s264 = scalar_lea.sflag [#allocation3], %s263
          %s265 = sand.u32 %s61, 1
          %s266 = smul.addr %s265, 4096
          %s267 = scalar_lea.vmem [#allocation2], %s266
          %269 = vsyncadd %s264, 0
          %s270 = smul.addr %s25, 512
          %s271 = smul.addr %s270, 8
          %s272 = scalar_lea.hbm %s1, %s271
          %s273 = sshll.u32 %s272, 4
          %s274 = int_to_ptr.hbm [resolvable:$true] %s273
          %s275 = sshll.u32 %s267, 4
          %s276 = int_to_ptr.vmem [resolvable:$true] %s275
          %281 = dma.hbm_to_vmem [thread:$0]  %s274, 65536, %s276, %s264, 512, 512, 32
        $region24: #{model_forward.1} parent=15 // pred_fallthru
          _
        // Predicated region
        $region25: #{model_forward.1} parent=15 // pred_check
          %p282 = pneg %p97
        $region26: #{model_forward.1} parent=15 // pred_check_branch
          %284 = sbr.rel (%p282) target = $region28
        $region27: #{model_forward.1} parent=15 // pred_region
          %s285 = sand.u32 %s25, 1
          %s286 = scalar_lea.sflag [#allocation5], %s285
          %s287 = sand.u32 %s87, 1
          %s288 = smul.addr %s287, 4
          %s289 = scalar_lea.vmem [#allocation4], %s288
          %291 = vsyncadd %s286, 0
          %s292 = smul.addr %s25, 4
          %s293 = scalar_lea.hbm %s2, %s292
          %s295 = sshll.u32 %s293, 4
          %s296 = int_to_ptr.hbm [resolvable:$true] %s295
          %s297 = sshll.u32 %s289, 4
          %s298 = int_to_ptr.vmem [resolvable:$true] %s297
          %300 = dma.hbm_to_vmem [thread:$0]  %s296, 64, %s298, %s286
        $region28: #{model_forward.1} parent=15 // pred_fallthru
          _
        // Predicated region
        $region29: #{model_forward.1} parent=15 // pred_check
          %p301 = pneg %p123
        $region30: #{model_forward.1} parent=15 // pred_check_branch
          %303 = sbr.rel (%p301) target = $region32
        $region31: #{model_forward.1} parent=15 // pred_region
          %s304 = sand.u32 %s25, 1
          %s305 = scalar_lea.sflag [#allocation5], %s304
          %s306 = sand.u32 %s113, 1
          %s307 = smul.addr %s306, 1024
          %s308 = scalar_lea.vmem [#allocation6], %s307
          %310 = vsyncadd %s305, 0
          %s311 = smul.addr %s25, 128
          %s312 = smul.addr %s311, 8
          %s313 = scalar_lea.hbm %s3, %s312
          %s314 = sshll.u32 %s313, 4
          %s315 = int_to_ptr.hbm [resolvable:$true] %s314
          %s316 = sshll.u32 %s308, 4
          %s317 = int_to_ptr.vmem [resolvable:$true] %s316
          %322 = dma.hbm_to_vmem [thread:$0]  %s315, 16384, %s317, %s305, 256, 256, 16
        $region32: #{model_forward.1} parent=15 // pred_fallthru
          _
        // Predicated region
        $region33: #{model_forward.1} parent=15 // pred_check
          %p323 = pneg %p149
        $region34: #{model_forward.1} parent=15 // pred_check_branch
          %325 = sbr.rel (%p323) target = $region36
        $region35: #{model_forward.1} parent=15 // pred_region
          %s326 = sand.u32 %s25, 1
          %s327 = scalar_lea.sflag [#allocation8], %s326
          %s328 = sand.u32 %s139, 1
          %s329 = smul.addr %s328, 2
          %s330 = scalar_lea.vmem [#allocation7], %s329
          %332 = vsyncadd %s327, 0
          %s333 = smul.addr %s25, 2
          %s334 = scalar_lea.hbm %s4, %s333
          %s336 = sshll.u32 %s334, 4
          %s337 = int_to_ptr.hbm [resolvable:$true] %s336
          %s338 = sshll.u32 %s330, 4
          %s339 = int_to_ptr.vmem [resolvable:$true] %s338
          %341 = dma.hbm_to_vmem [thread:$0]  %s337, 32, %s339, %s327
        $region36: #{model_forward.1} parent=15 // pred_fallthru
          _
        // Predicated region
        $region37: #{model_forward.1} parent=15 // pred_check
          %p342 = pneg %p175
        $region38: #{model_forward.1} parent=15 // pred_check_branch
          %344 = sbr.rel (%p342) target = $region40
        $region39: #{model_forward.1} parent=15 // pred_region
          %s345 = sand.u32 %s25, 1
          %s346 = scalar_lea.sflag [#allocation8], %s345
          %s347 = sand.u32 %s165, 1
          %s348 = smul.addr %s347, 256
          %s349 = scalar_lea.vmem [#allocation9], %s348
          %351 = vsyncadd %s346, 0
          %s352 = smul.addr %s25, 32
          %s353 = smul.addr %s352, 8
          %s354 = scalar_lea.hbm %s5, %s353
          %s355 = sshll.u32 %s354, 4
          %s356 = int_to_ptr.hbm [resolvable:$true] %s355
          %s357 = sshll.u32 %s349, 4
          %s358 = int_to_ptr.vmem [resolvable:$true] %s357
          %363 = dma.hbm_to_vmem [thread:$0]  %s356, 4096, %s358, %s346, 128, 128, 8
        $region40: #{model_forward.1} parent=15 // pred_fallthru
          _
        // Predicated region
        $region41: #{model_forward.1} parent=15 // pred_check
          %p364 = pneg %p201
        $region42: #{model_forward.1} parent=15 // pred_check_branch
          %366 = sbr.rel (%p364) target = $region44
        $region43: #{model_forward.1} parent=15 // pred_region
          %s367 = sand.u32 %s191, 1
          %s368 = scalar_lea.sflag [#allocation11], %s367
          %s369 = sand.u32 %s191, 1
          %s370 = scalar_lea.vmem [#allocation10], %s369
          %372 = vsyncadd %s368, 0
          %s373 = scalar_lea.hbm %s6, %s25
          %s375 = sshll.u32 %s373, 4
          %s376 = int_to_ptr.hbm [resolvable:$true] %s375
          %s377 = sshll.u32 %s370, 4
          %s378 = int_to_ptr.vmem [resolvable:$true] %s377
          %380 = dma.hbm_to_vmem [thread:$0]  %s376, 16, %s378, %s368
        $region44: #{model_forward.1} parent=15 // pred_fallthru
          _
      $region16: #{model_forward.1} parent=5 // pred_fallthru
        _
      %p381 = scmp.le.s32.totalorder 1, %s25
      %p382 = scmp.lt.s32.totalorder %s25, 5
      %p383 = pnand %p381, %p382
      %p384 = pneg %p383
      // Predicated region
      $region45: #{model_forward.1} parent=5 // pred_check
        _
      $region46: #{model_forward.1} parent=5 // pred_check_branch
        %386 = sbr.rel (%p383) target = $region48
      $region47: #{model_forward.1} parent=5 // pred_region
        %s387 = ssub.s32 %s25, 1
        %s388 = sand.u32 %s64, 1
        %s389 = scalar_lea.sflag [#allocation3], %s388
        %s390 = sand.u32 %s64, 1
        %s391 = smul.addr %s390, 4096
        %s392 = scalar_lea.vmem [#allocation2], %s391
        // Predicated region
        $region49: #{model_forward.1} parent=47 // pred_check
          %p393 = pneg %p77
        $region50: #{model_forward.1} parent=47 // pred_check_branch
          %395 = sbr.rel (%p393) target = $region52
        $region51: #{model_forward.1} parent=47 // pred_region
          %397 = dma.done %s389, 65536
        $region52: #{model_forward.1} parent=47 // pred_fallthru
          _
        %s398 = sand.u32 %s30, 1
        %s399 = scalar_lea.sflag [#allocation5], %s398
        %s400 = sand.u32 %s90, 1
        %s401 = smul.addr %s400, 4
        %s402 = scalar_lea.vmem [#allocation4], %s401
        // Predicated region
        $region53: #{model_forward.1} parent=47 // pred_check
          %p403 = pneg %p103
        $region54: #{model_forward.1} parent=47 // pred_check_branch
          %405 = sbr.rel (%p403) target = $region56
        $region55: #{model_forward.1} parent=47 // pred_region
          %407 = dma.done %s399, 64
        $region56: #{model_forward.1} parent=47 // pred_fallthru
          _
        %s408 = sand.u32 %s30, 1
        %s409 = scalar_lea.sflag [#allocation5], %s408
        %s410 = sand.u32 %s116, 1
        %s411 = smul.addr %s410, 1024
        %s412 = scalar_lea.vmem [#allocation6], %s411
        // Predicated region
        $region57: #{model_forward.1} parent=47 // pred_check
          %p413 = pneg %p129
        $region58: #{model_forward.1} parent=47 // pred_check_branch
          %415 = sbr.rel (%p413) target = $region60
        $region59: #{model_forward.1} parent=47 // pred_region
          %417 = dma.done %s409, 16384
        $region60: #{model_forward.1} parent=47 // pred_fallthru
          _
        %s418 = sand.u32 %s30, 1
        %s419 = scalar_lea.sflag [#allocation8], %s418
        %s420 = sand.u32 %s142, 1
        %s421 = smul.addr %s420, 2
        %s422 = scalar_lea.vmem [#allocation7], %s421
        // Predicated region
        $region61: #{model_forward.1} parent=47 // pred_check
          %p423 = pneg %p155
        $region62: #{model_forward.1} parent=47 // pred_check_branch
          %425 = sbr.rel (%p423) target = $region64
        $region63: #{model_forward.1} parent=47 // pred_region
          %427 = dma.done %s419, 32
        $region64: #{model_forward.1} parent=47 // pred_fallthru
          _
        %s428 = sand.u32 %s30, 1
        %s429 = scalar_lea.sflag [#allocation8], %s428
        %s430 = sand.u32 %s168, 1
        %s431 = smul.addr %s430, 256
        %s432 = scalar_lea.vmem [#allocation9], %s431
        // Predicated region
        $region65: #{model_forward.1} parent=47 // pred_check
          %p433 = pneg %p181
        $region66: #{model_forward.1} parent=47 // pred_check_branch
          %435 = sbr.rel (%p433) target = $region68
        $region67: #{model_forward.1} parent=47 // pred_region
          %437 = dma.done %s429, 4096
        $region68: #{model_forward.1} parent=47 // pred_fallthru
          _
        %s438 = sand.u32 %s194, 1
        %s439 = scalar_lea.sflag [#allocation11], %s438
        %s440 = sand.u32 %s194, 1
        %s441 = scalar_lea.vmem [#allocation10], %s440
        // Predicated region
        $region69: #{model_forward.1} parent=47 // pred_check
          %p442 = pneg %p207
        $region70: #{model_forward.1} parent=47 // pred_check_branch
          %444 = sbr.rel (%p442) target = $region72
        $region71: #{model_forward.1} parent=47 // pred_region
          %446 = dma.done %s439, 16
        $region72: #{model_forward.1} parent=47 // pred_fallthru
          _
        %p447 = scmp.lt.s32.totalorder %s30, 3
        %s448 = scalar_select %p447, %s30, 3
        %s449 = smul.addr %s448, 8
        %s450 = smul.addr %s449, 8
        %s451 = scalar_lea.vmem %s0, %s450
        %p452 = pneg %p51
        %p453 = pneg %p48
        %s454 = sand.u32 %s64, 1
        %s455 = scalar_lea.sflag [#allocation3], %s454
        %s456 = sand.u32 %s64, 1
        %s457 = smul.addr %s456, 4096
        %s458 = scalar_lea.vmem [#allocation2], %s457
        %p459 = pneg %p77
        %p460 = pneg %p74
        %s461 = sand.u32 %s30, 1
        %s462 = scalar_lea.sflag [#allocation5], %s461
        %s463 = sand.u32 %s90, 1
        %s464 = smul.addr %s463, 4
        %s465 = scalar_lea.vmem [#allocation4], %s464
        %p466 = pneg %p103
        %p467 = pneg %p100
        %s468 = sand.u32 %s30, 1
        %s469 = scalar_lea.sflag [#allocation5], %s468
        %s470 = sand.u32 %s116, 1
        %s471 = smul.addr %s470, 1024
        %s472 = scalar_lea.vmem [#allocation6], %s471
        %p473 = pneg %p129
        %p474 = pneg %p126
        %s475 = sand.u32 %s30, 1
        %s476 = scalar_lea.sflag [#allocation8], %s475
        %s477 = sand.u32 %s142, 1
        %s478 = smul.addr %s477, 2
        %s479 = scalar_lea.vmem [#allocation7], %s478
        %p480 = pneg %p155
        %p481 = pneg %p152
        %s482 = sand.u32 %s30, 1
        %s483 = scalar_lea.sflag [#allocation8], %s482
        %s484 = sand.u32 %s168, 1
        %s485 = smul.addr %s484, 256
        %s486 = scalar_lea.vmem [#allocation9], %s485
        %p487 = pneg %p181
        %p488 = pneg %p178
        %s489 = sand.u32 %s194, 1
        %s490 = scalar_lea.sflag [#allocation11], %s489
        %s491 = sand.u32 %s194, 1
        %s492 = scalar_lea.vmem [#allocation10], %s491
        %p493 = pneg %p207
        %p494 = pneg %p204
        %p495 = pneg %p233
        %p496 = pneg %p230
        %p497 = scmp.lt.s32.totalorder %s30, 3
        %s498 = scalar_select %p497, %s30, 3
        %s499 = smul.addr %s498, 8
        %s500 = scalar_lea.vmem %s7, %s499
        %p501 = scmp.lt.s32.totalorder %s30, 3
        %s502 = scalar_select %p501, %s30, 3
        %s503 = smul.addr %s502, 8
        %s504 = smul.addr %s503, 8
        %s505 = scalar_lea.vmem %s0, %s504
        %p506 = scmp.lt.s32.totalorder %s30, 3
        %s507 = scalar_select %p506, %s30, 3
        %s508 = smul.addr %s507, 8
        %s509 = scalar_lea.vmem %s7, %s508
        %v510 = vld [vmem:[%s505] sm:$0xff]
        %v511 = vld [vmem:[%s505 + $0x8] sm:$0xff]
        %v512 = vld [vmem:[%s505 + $0x10] sm:$0xff]
        %v513 = vld [vmem:[%s505 + $0x18] sm:$0xff]
        %v514 = vld [vmem:[%s505 + $0x20] sm:$0xff]
        %v515 = vld [vmem:[%s505 + $0x28] sm:$0xff]
        %v516 = vld [vmem:[%s505 + $0x30] sm:$0xff]
        %v517 = vld [vmem:[%s505 + $0x38] sm:$0xff]
        %v518 = vld [vmem:[%s392] sm:$0xff]
        %v519 = vld [vmem:[%s392 + $0x8] sm:$0xff]
        %v520 = vld [vmem:[%s392 + $0x10] sm:$0xff]
        %v521 = vld [vmem:[%s392 + $0x18] sm:$0xff]
        %v522 = vld [vmem:[%s392 + $0x20] sm:$0xff]
        %v523 = vld [vmem:[%s392 + $0x28] sm:$0xff]
        %v524 = vld [vmem:[%s392 + $0x30] sm:$0xff]
        %v525 = vld [vmem:[%s392 + $0x38] sm:$0xff]
        %v526 = vld [vmem:[%s392 + $0x40] sm:$0xff]
        %v527 = vld [vmem:[%s392 + $0x48] sm:$0xff]
        %v528 = vld [vmem:[%s392 + $0x50] sm:$0xff]
        %v529 = vld [vmem:[%s392 + $0x58] sm:$0xff]
        %v530 = vld [vmem:[%s392 + $0x60] sm:$0xff]
        %v531 = vld [vmem:[%s392 + $0x68] sm:$0xff]
        %v532 = vld [vmem:[%s392 + $0x70] sm:$0xff]
        %v533 = vld [vmem:[%s392 + $0x78] sm:$0xff]
        %v534 = vld [vmem:[%s392 + $0x80] sm:$0xff]
        %v535 = vld [vmem:[%s392 + $0x88] sm:$0xff]
        %v536 = vld [vmem:[%s392 + $0x90] sm:$0xff]
        %v537 = vld [vmem:[%s392 + $0x98] sm:$0xff]
        %v538 = vld [vmem:[%s392 + $0xa0] sm:$0xff]
        %v539 = vld [vmem:[%s392 + $0xa8] sm:$0xff]
        %v540 = vld [vmem:[%s392 + $0xb0] sm:$0xff]
        %v541 = vld [vmem:[%s392 + $0xb8] sm:$0xff]
        %v542 = vld [vmem:[%s392 + $0xc0] sm:$0xff]
        %v543 = vld [vmem:[%s392 + $0xc8] sm:$0xff]
        %v544 = vld [vmem:[%s392 + $0xd0] sm:$0xff]
        %v545 = vld [vmem:[%s392 + $0xd8] sm:$0xff]
        %v546 = vld [vmem:[%s392 + $0xe0] sm:$0xff]
        %v547 = vld [vmem:[%s392 + $0xe8] sm:$0xff]
        %v548 = vld [vmem:[%s392 + $0xf0] sm:$0xff]
        %v549 = vld [vmem:[%s392 + $0xf8] sm:$0xff]
        %v550 = vld [vmem:[%s392 + $0x100] sm:$0xff]
        %v551 = vld [vmem:[%s392 + $0x108] sm:$0xff]
        %v552 = vld [vmem:[%s392 + $0x110] sm:$0xff]
        %v553 = vld [vmem:[%s392 + $0x118] sm:$0xff]
        %v554 = vld [vmem:[%s392 + $0x120] sm:$0xff]
        %v555 = vld [vmem:[%s392 + $0x128] sm:$0xff]
        %v556 = vld [vmem:[%s392 + $0x130] sm:$0xff]
        %v557 = vld [vmem:[%s392 + $0x138] sm:$0xff]
        %v558 = vld [vmem:[%s392 + $0x140] sm:$0xff]
        %v559 = vld [vmem:[%s392 + $0x148] sm:$0xff]
        %v560 = vld [vmem:[%s392 + $0x150] sm:$0xff]
        %v561 = vld [vmem:[%s392 + $0x158] sm:$0xff]
        %v562 = vld [vmem:[%s392 + $0x160] sm:$0xff]
        %v563 = vld [vmem:[%s392 + $0x168] sm:$0xff]
        %v564 = vld [vmem:[%s392 + $0x170] sm:$0xff]
        %v565 = vld [vmem:[%s392 + $0x178] sm:$0xff]
        %v566 = vld [vmem:[%s392 + $0x180] sm:$0xff]
        %v567 = vld [vmem:[%s392 + $0x188] sm:$0xff]
        %v568 = vld [vmem:[%s392 + $0x190] sm:$0xff]
        %v569 = vld [vmem:[%s392 + $0x198] sm:$0xff]
        %v570 = vld [vmem:[%s392 + $0x1a0] sm:$0xff]
        %v571 = vld [vmem:[%s392 + $0x1a8] sm:$0xff]
        %v572 = vld [vmem:[%s392 + $0x1b0] sm:$0xff]
        %v573 = vld [vmem:[%s392 + $0x1b8] sm:$0xff]
        %v574 = vld [vmem:[%s392 + $0x1c0] sm:$0xff]
        %v575 = vld [vmem:[%s392 + $0x1c8] sm:$0xff]
        %v576 = vld [vmem:[%s392 + $0x1d0] sm:$0xff]
        %v577 = vld [vmem:[%s392 + $0x1d8] sm:$0xff]
        %v578 = vld [vmem:[%s392 + $0x1e0] sm:$0xff]
        %v579 = vld [vmem:[%s392 + $0x1e8] sm:$0xff]
        %v580 = vld [vmem:[%s392 + $0x1f0] sm:$0xff]
        %v581 = vld [vmem:[%s392 + $0x1f8] sm:$0xff]
        %v582 = vld [vmem:[%s392 + $0x200] sm:$0xff]
        %v583 = vld [vmem:[%s392 + $0x208] sm:$0xff]
        %v584 = vld [vmem:[%s392 + $0x210] sm:$0xff]
        %v585 = vld [vmem:[%s392 + $0x218] sm:$0xff]
        %v586 = vld [vmem:[%s392 + $0x220] sm:$0xff]
        %v587 = vld [vmem:[%s392 + $0x228] sm:$0xff]
        %v588 = vld [vmem:[%s392 + $0x230] sm:$0xff]
        %v589 = vld [vmem:[%s392 + $0x238] sm:$0xff]
        %v590 = vld [vmem:[%s392 + $0x240] sm:$0xff]
        %v591 = vld [vmem:[%s392 + $0x248] sm:$0xff]
        %v592 = vld [vmem:[%s392 + $0x250] sm:$0xff]
        %v593 = vld [vmem:[%s392 + $0x258] sm:$0xff]
        %v594 = vld [vmem:[%s392 + $0x260] sm:$0xff]
        %v595 = vld [vmem:[%s392 + $0x268] sm:$0xff]
        %v596 = vld [vmem:[%s392 + $0x270] sm:$0xff]
        %v597 = vld [vmem:[%s392 + $0x278] sm:$0xff]
        %v598 = vld [vmem:[%s392 + $0x280] sm:$0xff]
        %v599 = vld [vmem:[%s392 + $0x288] sm:$0xff]
        %v600 = vld [vmem:[%s392 + $0x290] sm:$0xff]
        %v601 = vld [vmem:[%s392 + $0x298] sm:$0xff]
        %v602 = vld [vmem:[%s392 + $0x2a0] sm:$0xff]
        %v603 = vld [vmem:[%s392 + $0x2a8] sm:$0xff]
        %v604 = vld [vmem:[%s392 + $0x2b0] sm:$0xff]
        %v605 = vld [vmem:[%s392 + $0x2b8] sm:$0xff]
        %v606 = vld [vmem:[%s392 + $0x2c0] sm:$0xff]
        %v607 = vld [vmem:[%s392 + $0x2c8] sm:$0xff]
        %v608 = vld [vmem:[%s392 + $0x2d0] sm:$0xff]
        %v609 = vld [vmem:[%s392 + $0x2d8] sm:$0xff]
        %v610 = vld [vmem:[%s392 + $0x2e0] sm:$0xff]
        %v611 = vld [vmem:[%s392 + $0x2e8] sm:$0xff]
        %v612 = vld [vmem:[%s392 + $0x2f0] sm:$0xff]
        %v613 = vld [vmem:[%s392 + $0x2f8] sm:$0xff]
        %v614 = vld [vmem:[%s392 + $0x300] sm:$0xff]
        %v615 = vld [vmem:[%s392 + $0x308] sm:$0xff]
        %v616 = vld [vmem:[%s392 + $0x310] sm:$0xff]
        %v617 = vld [vmem:[%s392 + $0x318] sm:$0xff]
        %v618 = vld [vmem:[%s392 + $0x320] sm:$0xff]
        %v619 = vld [vmem:[%s392 + $0x328] sm:$0xff]
        %v620 = vld [vmem:[%s392 + $0x330] sm:$0xff]
        %v621 = vld [vmem:[%s392 + $0x338] sm:$0xff]
        %v622 = vld [vmem:[%s392 + $0x340] sm:$0xff]
        %v623 = vld [vmem:[%s392 + $0x348] sm:$0xff]
        %v624 = vld [vmem:[%s392 + $0x350] sm:$0xff]
        %v625 = vld [vmem:[%s392 + $0x358] sm:$0xff]
        %v626 = vld [vmem:[%s392 + $0x360] sm:$0xff]
        %v627 = vld [vmem:[%s392 + $0x368] sm:$0xff]
        %v628 = vld [vmem:[%s392 + $0x370] sm:$0xff]
        %v629 = vld [vmem:[%s392 + $0x378] sm:$0xff]
        %v630 = vld [vmem:[%s392 + $0x380] sm:$0xff]
        %v631 = vld [vmem:[%s392 + $0x388] sm:$0xff]
        %v632 = vld [vmem:[%s392 + $0x390] sm:$0xff]
        %v633 = vld [vmem:[%s392 + $0x398] sm:$0xff]
        %v634 = vld [vmem:[%s392 + $0x3a0] sm:$0xff]
        %v635 = vld [vmem:[%s392 + $0x3a8] sm:$0xff]
        %v636 = vld [vmem:[%s392 + $0x3b0] sm:$0xff]
        %v637 = vld [vmem:[%s392 + $0x3b8] sm:$0xff]
        %v638 = vld [vmem:[%s392 + $0x3c0] sm:$0xff]
        %v639 = vld [vmem:[%s392 + $0x3c8] sm:$0xff]
        %v640 = vld [vmem:[%s392 + $0x3d0] sm:$0xff]
        %v641 = vld [vmem:[%s392 + $0x3d8] sm:$0xff]
        %v642 = vld [vmem:[%s392 + $0x3e0] sm:$0xff]
        %v643 = vld [vmem:[%s392 + $0x3e8] sm:$0xff]
        %v644 = vld [vmem:[%s392 + $0x3f0] sm:$0xff]
        %v645 = vld [vmem:[%s392 + $0x3f8] sm:$0xff]
        %v646 = vld [vmem:[%s392 + $0x400] sm:$0xff]
        %v647 = vld [vmem:[%s392 + $0x408] sm:$0xff]
        %v648 = vld [vmem:[%s392 + $0x410] sm:$0xff]
        %v649 = vld [vmem:[%s392 + $0x418] sm:$0xff]
        %v650 = vld [vmem:[%s392 + $0x420] sm:$0xff]
        %v651 = vld [vmem:[%s392 + $0x428] sm:$0xff]
        %v652 = vld [vmem:[%s392 + $0x430] sm:$0xff]
        %v653 = vld [vmem:[%s392 + $0x438] sm:$0xff]
        %v654 = vld [vmem:[%s392 + $0x440] sm:$0xff]
        %v655 = vld [vmem:[%s392 + $0x448] sm:$0xff]
        %v656 = vld [vmem:[%s392 + $0x450] sm:$0xff]
        %v657 = vld [vmem:[%s392 + $0x458] sm:$0xff]
        %v658 = vld [vmem:[%s392 + $0x460] sm:$0xff]
        %v659 = vld [vmem:[%s392 + $0x468] sm:$0xff]
        %v660 = vld [vmem:[%s392 + $0x470] sm:$0xff]
        %v661 = vld [vmem:[%s392 + $0x478] sm:$0xff]
        %v662 = vld [vmem:[%s392 + $0x480] sm:$0xff]
        %v663 = vld [vmem:[%s392 + $0x488] sm:$0xff]
        %v664 = vld [vmem:[%s392 + $0x490] sm:$0xff]
        %v665 = vld [vmem:[%s392 + $0x498] sm:$0xff]
        %v666 = vld [vmem:[%s392 + $0x4a0] sm:$0xff]
        %v667 = vld [vmem:[%s392 + $0x4a8] sm:$0xff]
        %v668 = vld [vmem:[%s392 + $0x4b0] sm:$0xff]
        %v669 = vld [vmem:[%s392 + $0x4b8] sm:$0xff]
        %v670 = vld [vmem:[%s392 + $0x4c0] sm:$0xff]
        %v671 = vld [vmem:[%s392 + $0x4c8] sm:$0xff]
        %v672 = vld [vmem:[%s392 + $0x4d0] sm:$0xff]
        %v673 = vld [vmem:[%s392 + $0x4d8] sm:$0xff]
        %v674 = vld [vmem:[%s392 + $0x4e0] sm:$0xff]
        %v675 = vld [vmem:[%s392 + $0x4e8] sm:$0xff]
        %v676 = vld [vmem:[%s392 + $0x4f0] sm:$0xff]
        %v677 = vld [vmem:[%s392 + $0x4f8] sm:$0xff]
        %v678 = vld [vmem:[%s392 + $0x500] sm:$0xff]
        %v679 = vld [vmem:[%s392 + $0x508] sm:$0xff]
        %v680 = vld [vmem:[%s392 + $0x510] sm:$0xff]
        %v681 = vld [vmem:[%s392 + $0x518] sm:$0xff]
        %v682 = vld [vmem:[%s392 + $0x520] sm:$0xff]
        %v683 = vld [vmem:[%s392 + $0x528] sm:$0xff]
        %v684 = vld [vmem:[%s392 + $0x530] sm:$0xff]
        %v685 = vld [vmem:[%s392 + $0x538] sm:$0xff]
        %v686 = vld [vmem:[%s392 + $0x540] sm:$0xff]
        %v687 = vld [vmem:[%s392 + $0x548] sm:$0xff]
        %v688 = vld [vmem:[%s392 + $0x550] sm:$0xff]
        %v689 = vld [vmem:[%s392 + $0x558] sm:$0xff]
        %v690 = vld [vmem:[%s392 + $0x560] sm:$0xff]
        %v691 = vld [vmem:[%s392 + $0x568] sm:$0xff]
        %v692 = vld [vmem:[%s392 + $0x570] sm:$0xff]
        %v693 = vld [vmem:[%s392 + $0x578] sm:$0xff]
        %v694 = vld [vmem:[%s392 + $0x580] sm:$0xff]
        %v695 = vld [vmem:[%s392 + $0x588] sm:$0xff]
        %v696 = vld [vmem:[%s392 + $0x590] sm:$0xff]
        %v697 = vld [vmem:[%s392 + $0x598] sm:$0xff]
        %v698 = vld [vmem:[%s392 + $0x5a0] sm:$0xff]
        %v699 = vld [vmem:[%s392 + $0x5a8] sm:$0xff]
        %v700 = vld [vmem:[%s392 + $0x5b0] sm:$0xff]
        %v701 = vld [vmem:[%s392 + $0x5b8] sm:$0xff]
        %v702 = vld [vmem:[%s392 + $0x5c0] sm:$0xff]
        %v703 = vld [vmem:[%s392 + $0x5c8] sm:$0xff]
        %v704 = vld [vmem:[%s392 + $0x5d0] sm:$0xff]
        %v705 = vld [vmem:[%s392 + $0x5d8] sm:$0xff]
        %v706 = vld [vmem:[%s392 + $0x5e0] sm:$0xff]
        %v707 = vld [vmem:[%s392 + $0x5e8] sm:$0xff]
        %v708 = vld [vmem:[%s392 + $0x5f0] sm:$0xff]
        %v709 = vld [vmem:[%s392 + $0x5f8] sm:$0xff]
        %v710 = vld [vmem:[%s392 + $0x600] sm:$0xff]
        %v711 = vld [vmem:[%s392 + $0x608] sm:$0xff]
        %v712 = vld [vmem:[%s392 + $0x610] sm:$0xff]
        %v713 = vld [vmem:[%s392 + $0x618] sm:$0xff]
        %v714 = vld [vmem:[%s392 + $0x620] sm:$0xff]
        %v715 = vld [vmem:[%s392 + $0x628] sm:$0xff]
        %v716 = vld [vmem:[%s392 + $0x630] sm:$0xff]
        %v717 = vld [vmem:[%s392 + $0x638] sm:$0xff]
        %v718 = vld [vmem:[%s392 + $0x640] sm:$0xff]
        %v719 = vld [vmem:[%s392 + $0x648] sm:$0xff]
        %v720 = vld [vmem:[%s392 + $0x650] sm:$0xff]
        %v721 = vld [vmem:[%s392 + $0x658] sm:$0xff]
        %v722 = vld [vmem:[%s392 + $0x660] sm:$0xff]
        %v723 = vld [vmem:[%s392 + $0x668] sm:$0xff]
        %v724 = vld [vmem:[%s392 + $0x670] sm:$0xff]
        %v725 = vld [vmem:[%s392 + $0x678] sm:$0xff]
        %v726 = vld [vmem:[%s392 + $0x680] sm:$0xff]
        %v727 = vld [vmem:[%s392 + $0x688] sm:$0xff]
        %v728 = vld [vmem:[%s392 + $0x690] sm:$0xff]
        %v729 = vld [vmem:[%s392 + $0x698] sm:$0xff]
        %v730 = vld [vmem:[%s392 + $0x6a0] sm:$0xff]
        %v731 = vld [vmem:[%s392 + $0x6a8] sm:$0xff]
        %v732 = vld [vmem:[%s392 + $0x6b0] sm:$0xff]
        %v733 = vld [vmem:[%s392 + $0x6b8] sm:$0xff]
        %v734 = vld [vmem:[%s392 + $0x6c0] sm:$0xff]
        %v735 = vld [vmem:[%s392 + $0x6c8] sm:$0xff]
        %v736 = vld [vmem:[%s392 + $0x6d0] sm:$0xff]
        %v737 = vld [vmem:[%s392 + $0x6d8] sm:$0xff]
        %v738 = vld [vmem:[%s392 + $0x6e0] sm:$0xff]
        %v739 = vld [vmem:[%s392 + $0x6e8] sm:$0xff]
        %v740 = vld [vmem:[%s392 + $0x6f0] sm:$0xff]
        %v741 = vld [vmem:[%s392 + $0x6f8] sm:$0xff]
        %v742 = vld [vmem:[%s392 + $0x700] sm:$0xff]
        %v743 = vld [vmem:[%s392 + $0x708] sm:$0xff]
        %v744 = vld [vmem:[%s392 + $0x710] sm:$0xff]
        %v745 = vld [vmem:[%s392 + $0x718] sm:$0xff]
        %v746 = vld [vmem:[%s392 + $0x720] sm:$0xff]
        %v747 = vld [vmem:[%s392 + $0x728] sm:$0xff]
        %v748 = vld [vmem:[%s392 + $0x730] sm:$0xff]
        %v749 = vld [vmem:[%s392 + $0x738] sm:$0xff]
        %v750 = vld [vmem:[%s392 + $0x740] sm:$0xff]
        %v751 = vld [vmem:[%s392 + $0x748] sm:$0xff]
        %v752 = vld [vmem:[%s392 + $0x750] sm:$0xff]
        %v753 = vld [vmem:[%s392 + $0x758] sm:$0xff]
        %v754 = vld [vmem:[%s392 + $0x760] sm:$0xff]
        %v755 = vld [vmem:[%s392 + $0x768] sm:$0xff]
        %v756 = vld [vmem:[%s392 + $0x770] sm:$0xff]
        %v757 = vld [vmem:[%s392 + $0x778] sm:$0xff]
        %v758 = vld [vmem:[%s392 + $0x780] sm:$0xff]
        %v759 = vld [vmem:[%s392 + $0x788] sm:$0xff]
        %v760 = vld [vmem:[%s392 + $0x790] sm:$0xff]
        %v761 = vld [vmem:[%s392 + $0x798] sm:$0xff]
        %v762 = vld [vmem:[%s392 + $0x7a0] sm:$0xff]
        %v763 = vld [vmem:[%s392 + $0x7a8] sm:$0xff]
        %v764 = vld [vmem:[%s392 + $0x7b0] sm:$0xff]
        %v765 = vld [vmem:[%s392 + $0x7b8] sm:$0xff]
        %v766 = vld [vmem:[%s392 + $0x7c0] sm:$0xff]
        %v767 = vld [vmem:[%s392 + $0x7c8] sm:$0xff]
        %v768 = vld [vmem:[%s392 + $0x7d0] sm:$0xff]
        %v769 = vld [vmem:[%s392 + $0x7d8] sm:$0xff]
        %v770 = vld [vmem:[%s392 + $0x7e0] sm:$0xff]
        %v771 = vld [vmem:[%s392 + $0x7e8] sm:$0xff]
        %v772 = vld [vmem:[%s392 + $0x7f0] sm:$0xff]
        %v773 = vld [vmem:[%s392 + $0x7f8] sm:$0xff]
        %v774 = vld [vmem:[%s392 + $0x800] sm:$0xff]
        %v775 = vld [vmem:[%s392 + $0x808] sm:$0xff]
        %v776 = vld [vmem:[%s392 + $0x810] sm:$0xff]
        %v777 = vld [vmem:[%s392 + $0x818] sm:$0xff]
        %v778 = vld [vmem:[%s392 + $0x820] sm:$0xff]
        %v779 = vld [vmem:[%s392 + $0x828] sm:$0xff]
        %v780 = vld [vmem:[%s392 + $0x830] sm:$0xff]
        %v781 = vld [vmem:[%s392 + $0x838] sm:$0xff]
        %v782 = vld [vmem:[%s392 + $0x840] sm:$0xff]
        %v783 = vld [vmem:[%s392 + $0x848] sm:$0xff]
        %v784 = vld [vmem:[%s392 + $0x850] sm:$0xff]
        %v785 = vld [vmem:[%s392 + $0x858] sm:$0xff]
        %v786 = vld [vmem:[%s392 + $0x860] sm:$0xff]
        %v787 = vld [vmem:[%s392 + $0x868] sm:$0xff]
        %v788 = vld [vmem:[%s392 + $0x870] sm:$0xff]
        %v789 = vld [vmem:[%s392 + $0x878] sm:$0xff]
        %v790 = vld [vmem:[%s392 + $0x880] sm:$0xff]
        %v791 = vld [vmem:[%s392 + $0x888] sm:$0xff]
        %v792 = vld [vmem:[%s392 + $0x890] sm:$0xff]
        %v793 = vld [vmem:[%s392 + $0x898] sm:$0xff]
        %v794 = vld [vmem:[%s392 + $0x8a0] sm:$0xff]
        %v795 = vld [vmem:[%s392 + $0x8a8] sm:$0xff]
        %v796 = vld [vmem:[%s392 + $0x8b0] sm:$0xff]
        %v797 = vld [vmem:[%s392 + $0x8b8] sm:$0xff]
        %v798 = vld [vmem:[%s392 + $0x8c0] sm:$0xff]
        %v799 = vld [vmem:[%s392 + $0x8c8] sm:$0xff]
        %v800 = vld [vmem:[%s392 + $0x8d0] sm:$0xff]
        %v801 = vld [vmem:[%s392 + $0x8d8] sm:$0xff]
        %v802 = vld [vmem:[%s392 + $0x8e0] sm:$0xff]
        %v803 = vld [vmem:[%s392 + $0x8e8] sm:$0xff]
        %v804 = vld [vmem:[%s392 + $0x8f0] sm:$0xff]
        %v805 = vld [vmem:[%s392 + $0x8f8] sm:$0xff]
        %v806 = vld [vmem:[%s392 + $0x900] sm:$0xff]
        %v807 = vld [vmem:[%s392 + $0x908] sm:$0xff]
        %v808 = vld [vmem:[%s392 + $0x910] sm:$0xff]
        %v809 = vld [vmem:[%s392 + $0x918] sm:$0xff]
        %v810 = vld [vmem:[%s392 + $0x920] sm:$0xff]
        %v811 = vld [vmem:[%s392 + $0x928] sm:$0xff]
        %v812 = vld [vmem:[%s392 + $0x930] sm:$0xff]
        %v813 = vld [vmem:[%s392 + $0x938] sm:$0xff]
        %v814 = vld [vmem:[%s392 + $0x940] sm:$0xff]
        %v815 = vld [vmem:[%s392 + $0x948] sm:$0xff]
        %v816 = vld [vmem:[%s392 + $0x950] sm:$0xff]
        %v817 = vld [vmem:[%s392 + $0x958] sm:$0xff]
        %v818 = vld [vmem:[%s392 + $0x960] sm:$0xff]
        %v819 = vld [vmem:[%s392 + $0x968] sm:$0xff]
        %v820 = vld [vmem:[%s392 + $0x970] sm:$0xff]
        %v821 = vld [vmem:[%s392 + $0x978] sm:$0xff]
        %v822 = vld [vmem:[%s392 + $0x980] sm:$0xff]
        %v823 = vld [vmem:[%s392 + $0x988] sm:$0xff]
        %v824 = vld [vmem:[%s392 + $0x990] sm:$0xff]
        %v825 = vld [vmem:[%s392 + $0x998] sm:$0xff]
        %v826 = vld [vmem:[%s392 + $0x9a0] sm:$0xff]
        %v827 = vld [vmem:[%s392 + $0x9a8] sm:$0xff]
        %v828 = vld [vmem:[%s392 + $0x9b0] sm:$0xff]
        %v829 = vld [vmem:[%s392 + $0x9b8] sm:$0xff]
        %v830 = vld [vmem:[%s392 + $0x9c0] sm:$0xff]
        %v831 = vld [vmem:[%s392 + $0x9c8] sm:$0xff]
        %v832 = vld [vmem:[%s392 + $0x9d0] sm:$0xff]
        %v833 = vld [vmem:[%s392 + $0x9d8] sm:$0xff]
        %v834 = vld [vmem:[%s392 + $0x9e0] sm:$0xff]
        %v835 = vld [vmem:[%s392 + $0x9e8] sm:$0xff]
        %v836 = vld [vmem:[%s392 + $0x9f0] sm:$0xff]
        %v837 = vld [vmem:[%s392 + $0x9f8] sm:$0xff]
        %v838 = vld [vmem:[%s392 + $0xa00] sm:$0xff]
        %v839 = vld [vmem:[%s392 + $0xa08] sm:$0xff]
        %v840 = vld [vmem:[%s392 + $0xa10] sm:$0xff]
        %v841 = vld [vmem:[%s392 + $0xa18] sm:$0xff]
        %v842 = vld [vmem:[%s392 + $0xa20] sm:$0xff]
        %v843 = vld [vmem:[%s392 + $0xa28] sm:$0xff]
        %v844 = vld [vmem:[%s392 + $0xa30] sm:$0xff]
        %v845 = vld [vmem:[%s392 + $0xa38] sm:$0xff]
        %v846 = vld [vmem:[%s392 + $0xa40] sm:$0xff]
        %v847 = vld [vmem:[%s392 + $0xa48] sm:$0xff]
        %v848 = vld [vmem:[%s392 + $0xa50] sm:$0xff]
        %v849 = vld [vmem:[%s392 + $0xa58] sm:$0xff]
        %v850 = vld [vmem:[%s392 + $0xa60] sm:$0xff]
        %v851 = vld [vmem:[%s392 + $0xa68] sm:$0xff]
        %v852 = vld [vmem:[%s392 + $0xa70] sm:$0xff]
        %v853 = vld [vmem:[%s392 + $0xa78] sm:$0xff]
        %v854 = vld [vmem:[%s392 + $0xa80] sm:$0xff]
        %v855 = vld [vmem:[%s392 + $0xa88] sm:$0xff]
        %v856 = vld [vmem:[%s392 + $0xa90] sm:$0xff]
        %v857 = vld [vmem:[%s392 + $0xa98] sm:$0xff]
        %v858 = vld [vmem:[%s392 + $0xaa0] sm:$0xff]
        %v859 = vld [vmem:[%s392 + $0xaa8] sm:$0xff]
        %v860 = vld [vmem:[%s392 + $0xab0] sm:$0xff]
        %v861 = vld [vmem:[%s392 + $0xab8] sm:$0xff]
        %v862 = vld [vmem:[%s392 + $0xac0] sm:$0xff]
        %v863 = vld [vmem:[%s392 + $0xac8] sm:$0xff]
        %v864 = vld [vmem:[%s392 + $0xad0] sm:$0xff]
        %v865 = vld [vmem:[%s392 + $0xad8] sm:$0xff]
        %v866 = vld [vmem:[%s392 + $0xae0] sm:$0xff]
        %v867 = vld [vmem:[%s392 + $0xae8] sm:$0xff]
        %v868 = vld [vmem:[%s392 + $0xaf0] sm:$0xff]
        %v869 = vld [vmem:[%s392 + $0xaf8] sm:$0xff]
        %v870 = vld [vmem:[%s392 + $0xb00] sm:$0xff]
        %v871 = vld [vmem:[%s392 + $0xb08] sm:$0xff]
        %v872 = vld [vmem:[%s392 + $0xb10] sm:$0xff]
        %v873 = vld [vmem:[%s392 + $0xb18] sm:$0xff]
        %v874 = vld [vmem:[%s392 + $0xb20] sm:$0xff]
        %v875 = vld [vmem:[%s392 + $0xb28] sm:$0xff]
        %v876 = vld [vmem:[%s392 + $0xb30] sm:$0xff]
        %v877 = vld [vmem:[%s392 + $0xb38] sm:$0xff]
        %v878 = vld [vmem:[%s392 + $0xb40] sm:$0xff]
        %v879 = vld [vmem:[%s392 + $0xb48] sm:$0xff]
        %v880 = vld [vmem:[%s392 + $0xb50] sm:$0xff]
        %v881 = vld [vmem:[%s392 + $0xb58] sm:$0xff]
        %v882 = vld [vmem:[%s392 + $0xb60] sm:$0xff]
        %v883 = vld [vmem:[%s392 + $0xb68] sm:$0xff]
        %v884 = vld [vmem:[%s392 + $0xb70] sm:$0xff]
        %v885 = vld [vmem:[%s392 + $0xb78] sm:$0xff]
        %v886 = vld [vmem:[%s392 + $0xb80] sm:$0xff]
        %v887 = vld [vmem:[%s392 + $0xb88] sm:$0xff]
        %v888 = vld [vmem:[%s392 + $0xb90] sm:$0xff]
        %v889 = vld [vmem:[%s392 + $0xb98] sm:$0xff]
        %v890 = vld [vmem:[%s392 + $0xba0] sm:$0xff]
        %v891 = vld [vmem:[%s392 + $0xba8] sm:$0xff]
        %v892 = vld [vmem:[%s392 + $0xbb0] sm:$0xff]
        %v893 = vld [vmem:[%s392 + $0xbb8] sm:$0xff]
        %v894 = vld [vmem:[%s392 + $0xbc0] sm:$0xff]
        %v895 = vld [vmem:[%s392 + $0xbc8] sm:$0xff]
        %v896 = vld [vmem:[%s392 + $0xbd0] sm:$0xff]
        %v897 = vld [vmem:[%s392 + $0xbd8] sm:$0xff]
        %v898 = vld [vmem:[%s392 + $0xbe0] sm:$0xff]
        %v899 = vld [vmem:[%s392 + $0xbe8] sm:$0xff]
        %v900 = vld [vmem:[%s392 + $0xbf0] sm:$0xff]
        %v901 = vld [vmem:[%s392 + $0xbf8] sm:$0xff]
        %v902 = vld [vmem:[%s392 + $0xc00] sm:$0xff]
        %v903 = vld [vmem:[%s392 + $0xc08] sm:$0xff]
        %v904 = vld [vmem:[%s392 + $0xc10] sm:$0xff]
        %v905 = vld [vmem:[%s392 + $0xc18] sm:$0xff]
        %v906 = vld [vmem:[%s392 + $0xc20] sm:$0xff]
        %v907 = vld [vmem:[%s392 + $0xc28] sm:$0xff]
        %v908 = vld [vmem:[%s392 + $0xc30] sm:$0xff]
        %v909 = vld [vmem:[%s392 + $0xc38] sm:$0xff]
        %v910 = vld [vmem:[%s392 + $0xc40] sm:$0xff]
        %v911 = vld [vmem:[%s392 + $0xc48] sm:$0xff]
        %v912 = vld [vmem:[%s392 + $0xc50] sm:$0xff]
        %v913 = vld [vmem:[%s392 + $0xc58] sm:$0xff]
        %v914 = vld [vmem:[%s392 + $0xc60] sm:$0xff]
        %v915 = vld [vmem:[%s392 + $0xc68] sm:$0xff]
        %v916 = vld [vmem:[%s392 + $0xc70] sm:$0xff]
        %v917 = vld [vmem:[%s392 + $0xc78] sm:$0xff]
        %v918 = vld [vmem:[%s392 + $0xc80] sm:$0xff]
        %v919 = vld [vmem:[%s392 + $0xc88] sm:$0xff]
        %v920 = vld [vmem:[%s392 + $0xc90] sm:$0xff]
        %v921 = vld [vmem:[%s392 + $0xc98] sm:$0xff]
        %v922 = vld [vmem:[%s392 + $0xca0] sm:$0xff]
        %v923 = vld [vmem:[%s392 + $0xca8] sm:$0xff]
        %v924 = vld [vmem:[%s392 + $0xcb0] sm:$0xff]
        %v925 = vld [vmem:[%s392 + $0xcb8] sm:$0xff]
        %v926 = vld [vmem:[%s392 + $0xcc0] sm:$0xff]
        %v927 = vld [vmem:[%s392 + $0xcc8] sm:$0xff]
        %v928 = vld [vmem:[%s392 + $0xcd0] sm:$0xff]
        %v929 = vld [vmem:[%s392 + $0xcd8] sm:$0xff]
        %v930 = vld [vmem:[%s392 + $0xce0] sm:$0xff]
        %v931 = vld [vmem:[%s392 + $0xce8] sm:$0xff]
        %v932 = vld [vmem:[%s392 + $0xcf0] sm:$0xff]
        %v933 = vld [vmem:[%s392 + $0xcf8] sm:$0xff]
        %v934 = vld [vmem:[%s392 + $0xd00] sm:$0xff]
        %v935 = vld [vmem:[%s392 + $0xd08] sm:$0xff]
        %v936 = vld [vmem:[%s392 + $0xd10] sm:$0xff]
        %v937 = vld [vmem:[%s392 + $0xd18] sm:$0xff]
        %v938 = vld [vmem:[%s392 + $0xd20] sm:$0xff]
        %v939 = vld [vmem:[%s392 + $0xd28] sm:$0xff]
        %v940 = vld [vmem:[%s392 + $0xd30] sm:$0xff]
        %v941 = vld [vmem:[%s392 + $0xd38] sm:$0xff]
        %v942 = vld [vmem:[%s392 + $0xd40] sm:$0xff]
        %v943 = vld [vmem:[%s392 + $0xd48] sm:$0xff]
        %v944 = vld [vmem:[%s392 + $0xd50] sm:$0xff]
        %v945 = vld [vmem:[%s392 + $0xd58] sm:$0xff]
        %v946 = vld [vmem:[%s392 + $0xd60] sm:$0xff]
        %v947 = vld [vmem:[%s392 + $0xd68] sm:$0xff]
        %v948 = vld [vmem:[%s392 + $0xd70] sm:$0xff]
        %v949 = vld [vmem:[%s392 + $0xd78] sm:$0xff]
        %v950 = vld [vmem:[%s392 + $0xd80] sm:$0xff]
        %v951 = vld [vmem:[%s392 + $0xd88] sm:$0xff]
        %v952 = vld [vmem:[%s392 + $0xd90] sm:$0xff]
        %v953 = vld [vmem:[%s392 + $0xd98] sm:$0xff]
        %v954 = vld [vmem:[%s392 + $0xda0] sm:$0xff]
        %v955 = vld [vmem:[%s392 + $0xda8] sm:$0xff]
        %v956 = vld [vmem:[%s392 + $0xdb0] sm:$0xff]
        %v957 = vld [vmem:[%s392 + $0xdb8] sm:$0xff]
        %v958 = vld [vmem:[%s392 + $0xdc0] sm:$0xff]
        %v959 = vld [vmem:[%s392 + $0xdc8] sm:$0xff]
        %v960 = vld [vmem:[%s392 + $0xdd0] sm:$0xff]
        %v961 = vld [vmem:[%s392 + $0xdd8] sm:$0xff]
        %v962 = vld [vmem:[%s392 + $0xde0] sm:$0xff]
        %v963 = vld [vmem:[%s392 + $0xde8] sm:$0xff]
        %v964 = vld [vmem:[%s392 + $0xdf0] sm:$0xff]
        %v965 = vld [vmem:[%s392 + $0xdf8] sm:$0xff]
        %v966 = vld [vmem:[%s392 + $0xe00] sm:$0xff]
        %v967 = vld [vmem:[%s392 + $0xe08] sm:$0xff]
        %v968 = vld [vmem:[%s392 + $0xe10] sm:$0xff]
        %v969 = vld [vmem:[%s392 + $0xe18] sm:$0xff]
        %v970 = vld [vmem:[%s392 + $0xe20] sm:$0xff]
        %v971 = vld [vmem:[%s392 + $0xe28] sm:$0xff]
        %v972 = vld [vmem:[%s392 + $0xe30] sm:$0xff]
        %v973 = vld [vmem:[%s392 + $0xe38] sm:$0xff]
        %v974 = vld [vmem:[%s392 + $0xe40] sm:$0xff]
        %v975 = vld [vmem:[%s392 + $0xe48] sm:$0xff]
        %v976 = vld [vmem:[%s392 + $0xe50] sm:$0xff]
        %v977 = vld [vmem:[%s392 + $0xe58] sm:$0xff]
        %v978 = vld [vmem:[%s392 + $0xe60] sm:$0xff]
        %v979 = vld [vmem:[%s392 + $0xe68] sm:$0xff]
        %v980 = vld [vmem:[%s392 + $0xe70] sm:$0xff]
        %v981 = vld [vmem:[%s392 + $0xe78] sm:$0xff]
        %v982 = vld [vmem:[%s392 + $0xe80] sm:$0xff]
        %v983 = vld [vmem:[%s392 + $0xe88] sm:$0xff]
        %v984 = vld [vmem:[%s392 + $0xe90] sm:$0xff]
        %v985 = vld [vmem:[%s392 + $0xe98] sm:$0xff]
        %v986 = vld [vmem:[%s392 + $0xea0] sm:$0xff]
        %v987 = vld [vmem:[%s392 + $0xea8] sm:$0xff]
        %v988 = vld [vmem:[%s392 + $0xeb0] sm:$0xff]
        %v989 = vld [vmem:[%s392 + $0xeb8] sm:$0xff]
        %v990 = vld [vmem:[%s392 + $0xec0] sm:$0xff]
        %v991 = vld [vmem:[%s392 + $0xec8] sm:$0xff]
        %v992 = vld [vmem:[%s392 + $0xed0] sm:$0xff]
        %v993 = vld [vmem:[%s392 + $0xed8] sm:$0xff]
        %v994 = vld [vmem:[%s392 + $0xee0] sm:$0xff]
        %v995 = vld [vmem:[%s392 + $0xee8] sm:$0xff]
        %v996 = vld [vmem:[%s392 + $0xef0] sm:$0xff]
        %v997 = vld [vmem:[%s392 + $0xef8] sm:$0xff]
        %v998 = vld [vmem:[%s392 + $0xf00] sm:$0xff]
        %v999 = vld [vmem:[%s392 + $0xf08] sm:$0xff]
        %v1000 = vld [vmem:[%s392 + $0xf10] sm:$0xff]
        %v1001 = vld [vmem:[%s392 + $0xf18] sm:$0xff]
        %v1002 = vld [vmem:[%s392 + $0xf20] sm:$0xff]
        %v1003 = vld [vmem:[%s392 + $0xf28] sm:$0xff]
        %v1004 = vld [vmem:[%s392 + $0xf30] sm:$0xff]
        %v1005 = vld [vmem:[%s392 + $0xf38] sm:$0xff]
        %v1006 = vld [vmem:[%s392 + $0xf40] sm:$0xff]
        %v1007 = vld [vmem:[%s392 + $0xf48] sm:$0xff]
        %v1008 = vld [vmem:[%s392 + $0xf50] sm:$0xff]
        %v1009 = vld [vmem:[%s392 + $0xf58] sm:$0xff]
        %v1010 = vld [vmem:[%s392 + $0xf60] sm:$0xff]
        %v1011 = vld [vmem:[%s392 + $0xf68] sm:$0xff]
        %v1012 = vld [vmem:[%s392 + $0xf70] sm:$0xff]
        %v1013 = vld [vmem:[%s392 + $0xf78] sm:$0xff]
        %v1014 = vld [vmem:[%s392 + $0xf80] sm:$0xff]
        %v1015 = vld [vmem:[%s392 + $0xf88] sm:$0xff]
        %v1016 = vld [vmem:[%s392 + $0xf90] sm:$0xff]
        %v1017 = vld [vmem:[%s392 + $0xf98] sm:$0xff]
        %v1018 = vld [vmem:[%s392 + $0xfa0] sm:$0xff]
        %v1019 = vld [vmem:[%s392 + $0xfa8] sm:$0xff]
        %v1020 = vld [vmem:[%s392 + $0xfb0] sm:$0xff]
        %v1021 = vld [vmem:[%s392 + $0xfb8] sm:$0xff]
        %v1022 = vld [vmem:[%s392 + $0xfc0] sm:$0xff]
        %v1023 = vld [vmem:[%s392 + $0xfc8] sm:$0xff]
        %v1024 = vld [vmem:[%s392 + $0xfd0] sm:$0xff]
        %v1025 = vld [vmem:[%s392 + $0xfd8] sm:$0xff]
        %v1026 = vld [vmem:[%s392 + $0xfe0] sm:$0xff]
        %v1027 = vld [vmem:[%s392 + $0xfe8] sm:$0xff]
        %v1028 = vld [vmem:[%s392 + $0xff0] sm:$0xff]
        %v1029 = vld [vmem:[%s392 + $0xff8] sm:$0xff]
        %v1030 = vld [vmem:[%s402] sm:$0xf]
        %v1032 = vperm.slane %v1030, 0
        %v1033 = vperm.slane %v1030, 1
        %v1034 = vperm.slane %v1030, 2
        %v1035 = vperm.slane %v1030, 3
        %1040 = vmatpush.msra.mxu0 %v578
        %1041 = vmatpush.msra.mxu0 %v574
        %1042 = vmatpush.msra.mxu0 %v570
        %1043 = vmatpush.msra.mxu0 %v566
        %1044 = vmatpush.msra.mxu0 %v562
        %1045 = vmatpush.msra.mxu0 %v558
        %1046 = vmatpush.msra.mxu0 %v554
        %1047 = vmatpush.msra.mxu0 %v550
        %1048 = vmatpush.msra.mxu0 %v546
        %1049 = vmatpush.msra.mxu0 %v542
        %1050 = vmatpush.msra.mxu0 %v538
        %1051 = vmatpush.msra.mxu0 %v534
        %1052 = vmatpush.msra.mxu0 %v530
        %1053 = vmatpush.msra.mxu0 %v526
        %1054 = vmatpush.msra.mxu0 %v522
        %1055 = vmatpush.msra.mxu0 %v518
        %1056 = vmatmul.f32.gmra.mxu0 %v510
        %v1057 = vpop.f32.mrf.mxu0
        %v1058 = vadd.f32 %v1032, %v1057
        %1059 = vdwg.mxu0
        %1060 = vmatpush.msra.mxu0 %v642
        %1061 = vmatpush.msra.mxu0 %v638
        %1062 = vmatpush.msra.mxu0 %v634
        %1063 = vmatpush.msra.mxu0 %v630
        %1064 = vmatpush.msra.mxu0 %v626
        %1065 = vmatpush.msra.mxu0 %v622
        %1066 = vmatpush.msra.mxu0 %v618
        %1067 = vmatpush.msra.mxu0 %v614
        %1068 = vmatpush.msra.mxu0 %v610
        %1069 = vmatpush.msra.mxu0 %v606
        %1070 = vmatpush.msra.mxu0 %v602
        %1071 = vmatpush.msra.mxu0 %v598
        %1072 = vmatpush.msra.mxu0 %v594
        %1073 = vmatpush.msra.mxu0 %v590
        %1074 = vmatpush.msra.mxu0 %v586
        %1075 = vmatpush.msra.mxu0 %v582
        %1076 = vmatmul.f32.gmra.mxu0 %v511
        %v1077 = vpop.f32.mrf.mxu0
        %v1078 = vadd.f32 %v1058, %v1077
        %1079 = vdwg.mxu0
        %1080 = vmatpush.msra.mxu0 %v706
        %1081 = vmatpush.msra.mxu0 %v702
        %1082 = vmatpush.msra.mxu0 %v698
        %1083 = vmatpush.msra.mxu0 %v694
        %1084 = vmatpush.msra.mxu0 %v690
        %1085 = vmatpush.msra.mxu0 %v686
        %1086 = vmatpush.msra.mxu0 %v682
        %1087 = vmatpush.msra.mxu0 %v678
        %1088 = vmatpush.msra.mxu0 %v674
        %1089 = vmatpush.msra.mxu0 %v670
        %1090 = vmatpush.msra.mxu0 %v666
        %1091 = vmatpush.msra.mxu0 %v662
        %1092 = vmatpush.msra.mxu0 %v658
        %1093 = vmatpush.msra.mxu0 %v654
        %1094 = vmatpush.msra.mxu0 %v650
        %1095 = vmatpush.msra.mxu0 %v646
        %1096 = vmatmul.f32.gmra.mxu0 %v512
        %v1097 = vpop.f32.mrf.mxu0
        %v1098 = vadd.f32 %v1078, %v1097
        %1099 = vdwg.mxu0
        %1100 = vmatpush.msra.mxu0 %v770
        %1101 = vmatpush.msra.mxu0 %v766
        %1102 = vmatpush.msra.mxu0 %v762
        %1103 = vmatpush.msra.mxu0 %v758
        %1104 = vmatpush.msra.mxu0 %v754
        %1105 = vmatpush.msra.mxu0 %v750
        %1106 = vmatpush.msra.mxu0 %v746
        %1107 = vmatpush.msra.mxu0 %v742
        %1108 = vmatpush.msra.mxu0 %v738
        %1109 = vmatpush.msra.mxu0 %v734
        %1110 = vmatpush.msra.mxu0 %v730
        %1111 = vmatpush.msra.mxu0 %v726
        %1112 = vmatpush.msra.mxu0 %v722
        %1113 = vmatpush.msra.mxu0 %v718
        %1114 = vmatpush.msra.mxu0 %v714
        %1115 = vmatpush.msra.mxu0 %v710
        %1116 = vmatmul.f32.gmra.mxu0 %v513
        %v1117 = vpop.f32.mrf.mxu0
        %v1118 = vadd.f32 %v1098, %v1117
        %1119 = vdwg.mxu0
        %1120 = vmatpush.msra.mxu0 %v834
        %1121 = vmatpush.msra.mxu0 %v830
        %1122 = vmatpush.msra.mxu0 %v826
        %1123 = vmatpush.msra.mxu0 %v822
        %1124 = vmatpush.msra.mxu0 %v818
        %1125 = vmatpush.msra.mxu0 %v814
        %1126 = vmatpush.msra.mxu0 %v810
        %1127 = vmatpush.msra.mxu0 %v806
        %1128 = vmatpush.msra.mxu0 %v802
        %1129 = vmatpush.msra.mxu0 %v798
        %1130 = vmatpush.msra.mxu0 %v794
        %1131 = vmatpush.msra.mxu0 %v790
        %1132 = vmatpush.msra.mxu0 %v786
        %1133 = vmatpush.msra.mxu0 %v782
        %1134 = vmatpush.msra.mxu0 %v778
        %1135 = vmatpush.msra.mxu0 %v774
        %1136 = vmatmul.f32.gmra.mxu0 %v514
        %v1137 = vpop.f32.mrf.mxu0
        %v1138 = vadd.f32 %v1118, %v1137
        %1139 = vdwg.mxu0
        %1140 = vmatpush.msra.mxu0 %v898
        %1141 = vmatpush.msra.mxu0 %v894
        %1142 = vmatpush.msra.mxu0 %v890
        %1143 = vmatpush.msra.mxu0 %v886
        %1144 = vmatpush.msra.mxu0 %v882
        %1145 = vmatpush.msra.mxu0 %v878
        %1146 = vmatpush.msra.mxu0 %v874
        %1147 = vmatpush.msra.mxu0 %v870
        %1148 = vmatpush.msra.mxu0 %v866
        %1149 = vmatpush.msra.mxu0 %v862
        %1150 = vmatpush.msra.mxu0 %v858
        %1151 = vmatpush.msra.mxu0 %v854
        %1152 = vmatpush.msra.mxu0 %v850
        %1153 = vmatpush.msra.mxu0 %v846
        %1154 = vmatpush.msra.mxu0 %v842
        %1155 = vmatpush.msra.mxu0 %v838
        %1156 = vmatmul.f32.gmra.mxu0 %v515
        %v1157 = vpop.f32.mrf.mxu0
        %v1158 = vadd.f32 %v1138, %v1157
        %1159 = vdwg.mxu0
        %1160 = vmatpush.msra.mxu0 %v962
        %1161 = vmatpush.msra.mxu0 %v958
        %1162 = vmatpush.msra.mxu0 %v954
        %1163 = vmatpush.msra.mxu0 %v950
        %1164 = vmatpush.msra.mxu0 %v946
        %1165 = vmatpush.msra.mxu0 %v942
        %1166 = vmatpush.msra.mxu0 %v938
        %1167 = vmatpush.msra.mxu0 %v934
        %1168 = vmatpush.msra.mxu0 %v930
        %1169 = vmatpush.msra.mxu0 %v926
        %1170 = vmatpush.msra.mxu0 %v922
        %1171 = vmatpush.msra.mxu0 %v918
        %1172 = vmatpush.msra.mxu0 %v914
        %1173 = vmatpush.msra.mxu0 %v910
        %1174 = vmatpush.msra.mxu0 %v906
        %1175 = vmatpush.msra.mxu0 %v902
        %1176 = vmatmul.f32.gmra.mxu0 %v516
        %v1177 = vpop.f32.mrf.mxu0
        %v1178 = vadd.f32 %v1158, %v1177
        %1179 = vdwg.mxu0
        %1180 = vmatpush.msra.mxu0 %v1026
        %1181 = vmatpush.msra.mxu0 %v1022
        %1182 = vmatpush.msra.mxu0 %v1018
        %1183 = vmatpush.msra.mxu0 %v1014
        %1184 = vmatpush.msra.mxu0 %v1010
        %1185 = vmatpush.msra.mxu0 %v1006
        %1186 = vmatpush.msra.mxu0 %v1002
        %1187 = vmatpush.msra.mxu0 %v998
        %1188 = vmatpush.msra.mxu0 %v994
        %1189 = vmatpush.msra.mxu0 %v990
        %1190 = vmatpush.msra.mxu0 %v986
        %1191 = vmatpush.msra.mxu0 %v982
        %1192 = vmatpush.msra.mxu0 %v978
        %1193 = vmatpush.msra.mxu0 %v974
        %1194 = vmatpush.msra.mxu0 %v970
        %1195 = vmatpush.msra.mxu0 %v966
        %1196 = vmatmul.f32.gmra.mxu0 %v517
        %v1197 = vpop.f32.mrf.mxu0
        %v1198 = vadd.f32 %v1178, %v1197
        %1199 = vdwg.mxu0
        %1200 = vmatpush.msra.mxu0 %v579
        %1201 = vmatpush.msra.mxu0 %v575
        %1202 = vmatpush.msra.mxu0 %v571
        %1203 = vmatpush.msra.mxu0 %v567
        %1204 = vmatpush.msra.mxu0 %v563
        %1205 = vmatpush.msra.mxu0 %v559
        %1206 = vmatpush.msra.mxu0 %v555
        %1207 = vmatpush.msra.mxu0 %v551
        %1208 = vmatpush.msra.mxu0 %v547
        %1209 = vmatpush.msra.mxu0 %v543
        %1210 = vmatpush.msra.mxu0 %v539
        %1211 = vmatpush.msra.mxu0 %v535
        %1212 = vmatpush.msra.mxu0 %v531
        %1213 = vmatpush.msra.mxu0 %v527
        %1214 = vmatpush.msra.mxu0 %v523
        %1215 = vmatpush.msra.mxu0 %v519
        %1216 = vmatmul.f32.gmra.mxu0 %v510
        %v1217 = vpop.f32.mrf.mxu0
        %v1218 = vadd.f32 %v1033, %v1217
        %1219 = vdwg.mxu0
        %1220 = vmatpush.msra.mxu0 %v643
        %1221 = vmatpush.msra.mxu0 %v639
        %1222 = vmatpush.msra.mxu0 %v635
        %1223 = vmatpush.msra.mxu0 %v631
        %1224 = vmatpush.msra.mxu0 %v627
        %1225 = vmatpush.msra.mxu0 %v623
        %1226 = vmatpush.msra.mxu0 %v619
        %1227 = vmatpush.msra.mxu0 %v615
        %1228 = vmatpush.msra.mxu0 %v611
        %1229 = vmatpush.msra.mxu0 %v607
        %1230 = vmatpush.msra.mxu0 %v603
        %1231 = vmatpush.msra.mxu0 %v599
        %1232 = vmatpush.msra.mxu0 %v595
        %1233 = vmatpush.msra.mxu0 %v591
        %1234 = vmatpush.msra.mxu0 %v587
        %1235 = vmatpush.msra.mxu0 %v583
        %1236 = vmatmul.f32.gmra.mxu0 %v511
        %v1237 = vpop.f32.mrf.mxu0
        %v1238 = vadd.f32 %v1218, %v1237
        %1239 = vdwg.mxu0
        %1240 = vmatpush.msra.mxu0 %v707
        %1241 = vmatpush.msra.mxu0 %v703
        %1242 = vmatpush.msra.mxu0 %v699
        %1243 = vmatpush.msra.mxu0 %v695
        %1244 = vmatpush.msra.mxu0 %v691
        %1245 = vmatpush.msra.mxu0 %v687
        %1246 = vmatpush.msra.mxu0 %v683
        %1247 = vmatpush.msra.mxu0 %v679
        %1248 = vmatpush.msra.mxu0 %v675
        %1249 = vmatpush.msra.mxu0 %v671
        %1250 = vmatpush.msra.mxu0 %v667
        %1251 = vmatpush.msra.mxu0 %v663
        %1252 = vmatpush.msra.mxu0 %v659
        %1253 = vmatpush.msra.mxu0 %v655
        %1254 = vmatpush.msra.mxu0 %v651
        %1255 = vmatpush.msra.mxu0 %v647
        %1256 = vmatmul.f32.gmra.mxu0 %v512
        %v1257 = vpop.f32.mrf.mxu0
        %v1258 = vadd.f32 %v1238, %v1257
        %1259 = vdwg.mxu0
        %1260 = vmatpush.msra.mxu0 %v771
        %1261 = vmatpush.msra.mxu0 %v767
        %1262 = vmatpush.msra.mxu0 %v763
        %1263 = vmatpush.msra.mxu0 %v759
        %1264 = vmatpush.msra.mxu0 %v755
        %1265 = vmatpush.msra.mxu0 %v751
        %1266 = vmatpush.msra.mxu0 %v747
        %1267 = vmatpush.msra.mxu0 %v743
        %1268 = vmatpush.msra.mxu0 %v739
        %1269 = vmatpush.msra.mxu0 %v735
        %1270 = vmatpush.msra.mxu0 %v731
        %1271 = vmatpush.msra.mxu0 %v727
        %1272 = vmatpush.msra.mxu0 %v723
        %1273 = vmatpush.msra.mxu0 %v719
        %1274 = vmatpush.msra.mxu0 %v715
        %1275 = vmatpush.msra.mxu0 %v711
        %1276 = vmatmul.f32.gmra.mxu0 %v513
        %v1277 = vpop.f32.mrf.mxu0
        %v1278 = vadd.f32 %v1258, %v1277
        %1279 = vdwg.mxu0
        %1280 = vmatpush.msra.mxu0 %v835
        %1281 = vmatpush.msra.mxu0 %v831
        %1282 = vmatpush.msra.mxu0 %v827
        %1283 = vmatpush.msra.mxu0 %v823
        %1284 = vmatpush.msra.mxu0 %v819
        %1285 = vmatpush.msra.mxu0 %v815
        %1286 = vmatpush.msra.mxu0 %v811
        %1287 = vmatpush.msra.mxu0 %v807
        %1288 = vmatpush.msra.mxu0 %v803
        %1289 = vmatpush.msra.mxu0 %v799
        %1290 = vmatpush.msra.mxu0 %v795
        %1291 = vmatpush.msra.mxu0 %v791
        %1292 = vmatpush.msra.mxu0 %v787
        %1293 = vmatpush.msra.mxu0 %v783
        %1294 = vmatpush.msra.mxu0 %v779
        %1295 = vmatpush.msra.mxu0 %v775
        %1296 = vmatmul.f32.gmra.mxu0 %v514
        %v1297 = vpop.f32.mrf.mxu0
        %v1298 = vadd.f32 %v1278, %v1297
        %1299 = vdwg.mxu0
        %1300 = vmatpush.msra.mxu0 %v899
        %1301 = vmatpush.msra.mxu0 %v895
        %1302 = vmatpush.msra.mxu0 %v891
        %1303 = vmatpush.msra.mxu0 %v887
        %1304 = vmatpush.msra.mxu0 %v883
        %1305 = vmatpush.msra.mxu0 %v879
        %1306 = vmatpush.msra.mxu0 %v875
        %1307 = vmatpush.msra.mxu0 %v871
        %1308 = vmatpush.msra.mxu0 %v867
        %1309 = vmatpush.msra.mxu0 %v863
        %1310 = vmatpush.msra.mxu0 %v859
        %1311 = vmatpush.msra.mxu0 %v855
        %1312 = vmatpush.msra.mxu0 %v851
        %1313 = vmatpush.msra.mxu0 %v847
        %1314 = vmatpush.msra.mxu0 %v843
        %1315 = vmatpush.msra.mxu0 %v839
        %1316 = vmatmul.f32.gmra.mxu0 %v515
        %v1317 = vpop.f32.mrf.mxu0
        %v1318 = vadd.f32 %v1298, %v1317
        %1319 = vdwg.mxu0
        %1320 = vmatpush.msra.mxu0 %v963
        %1321 = vmatpush.msra.mxu0 %v959
        %1322 = vmatpush.msra.mxu0 %v955
        %1323 = vmatpush.msra.mxu0 %v951
        %1324 = vmatpush.msra.mxu0 %v947
        %1325 = vmatpush.msra.mxu0 %v943
        %1326 = vmatpush.msra.mxu0 %v939
        %1327 = vmatpush.msra.mxu0 %v935
        %1328 = vmatpush.msra.mxu0 %v931
        %1329 = vmatpush.msra.mxu0 %v927
        %1330 = vmatpush.msra.mxu0 %v923
        %1331 = vmatpush.msra.mxu0 %v919
        %1332 = vmatpush.msra.mxu0 %v915
        %1333 = vmatpush.msra.mxu0 %v911
        %1334 = vmatpush.msra.mxu0 %v907
        %1335 = vmatpush.msra.mxu0 %v903
        %1336 = vmatmul.f32.gmra.mxu0 %v516
        %v1337 = vpop.f32.mrf.mxu0
        %v1338 = vadd.f32 %v1318, %v1337
        %1339 = vdwg.mxu0
        %1340 = vmatpush.msra.mxu0 %v1027
        %1341 = vmatpush.msra.mxu0 %v1023
        %1342 = vmatpush.msra.mxu0 %v1019
        %1343 = vmatpush.msra.mxu0 %v1015
        %1344 = vmatpush.msra.mxu0 %v1011
        %1345 = vmatpush.msra.mxu0 %v1007
        %1346 = vmatpush.msra.mxu0 %v1003
        %1347 = vmatpush.msra.mxu0 %v999
        %1348 = vmatpush.msra.mxu0 %v995
        %1349 = vmatpush.msra.mxu0 %v991
        %1350 = vmatpush.msra.mxu0 %v987
        %1351 = vmatpush.msra.mxu0 %v983
        %1352 = vmatpush.msra.mxu0 %v979
        %1353 = vmatpush.msra.mxu0 %v975
        %1354 = vmatpush.msra.mxu0 %v971
        %1355 = vmatpush.msra.mxu0 %v967
        %1356 = vmatmul.f32.gmra.mxu0 %v517
        %v1357 = vpop.f32.mrf.mxu0
        %v1358 = vadd.f32 %v1338, %v1357
        %1359 = vdwg.mxu0
        %1360 = vmatpush.msra.mxu0 %v580
        %1361 = vmatpush.msra.mxu0 %v576
        %1362 = vmatpush.msra.mxu0 %v572
        %1363 = vmatpush.msra.mxu0 %v568
        %1364 = vmatpush.msra.mxu0 %v564
        %1365 = vmatpush.msra.mxu0 %v560
        %1366 = vmatpush.msra.mxu0 %v556
        %1367 = vmatpush.msra.mxu0 %v552
        %1368 = vmatpush.msra.mxu0 %v548
        %1369 = vmatpush.msra.mxu0 %v544
        %1370 = vmatpush.msra.mxu0 %v540
        %1371 = vmatpush.msra.mxu0 %v536
        %1372 = vmatpush.msra.mxu0 %v532
        %1373 = vmatpush.msra.mxu0 %v528
        %1374 = vmatpush.msra.mxu0 %v524
        %1375 = vmatpush.msra.mxu0 %v520
        %1376 = vmatmul.f32.gmra.mxu0 %v510
        %v1377 = vpop.f32.mrf.mxu0
        %v1378 = vadd.f32 %v1034, %v1377
        %1379 = vdwg.mxu0
        %1380 = vmatpush.msra.mxu0 %v644
        %1381 = vmatpush.msra.mxu0 %v640
        %1382 = vmatpush.msra.mxu0 %v636
        %1383 = vmatpush.msra.mxu0 %v632
        %1384 = vmatpush.msra.mxu0 %v628
        %1385 = vmatpush.msra.mxu0 %v624
        %1386 = vmatpush.msra.mxu0 %v620
        %1387 = vmatpush.msra.mxu0 %v616
        %1388 = vmatpush.msra.mxu0 %v612
        %1389 = vmatpush.msra.mxu0 %v608
        %1390 = vmatpush.msra.mxu0 %v604
        %1391 = vmatpush.msra.mxu0 %v600
        %1392 = vmatpush.msra.mxu0 %v596
        %1393 = vmatpush.msra.mxu0 %v592
        %1394 = vmatpush.msra.mxu0 %v588
        %1395 = vmatpush.msra.mxu0 %v584
        %1396 = vmatmul.f32.gmra.mxu0 %v511
        %v1397 = vpop.f32.mrf.mxu0
        %v1398 = vadd.f32 %v1378, %v1397
        %1399 = vdwg.mxu0
        %1400 = vmatpush.msra.mxu0 %v708
        %1401 = vmatpush.msra.mxu0 %v704
        %1402 = vmatpush.msra.mxu0 %v700
        %1403 = vmatpush.msra.mxu0 %v696
        %1404 = vmatpush.msra.mxu0 %v692
        %1405 = vmatpush.msra.mxu0 %v688
        %1406 = vmatpush.msra.mxu0 %v684
        %1407 = vmatpush.msra.mxu0 %v680
        %1408 = vmatpush.msra.mxu0 %v676
        %1409 = vmatpush.msra.mxu0 %v672
        %1410 = vmatpush.msra.mxu0 %v668
        %1411 = vmatpush.msra.mxu0 %v664
        %1412 = vmatpush.msra.mxu0 %v660
        %1413 = vmatpush.msra.mxu0 %v656
        %1414 = vmatpush.msra.mxu0 %v652
        %1415 = vmatpush.msra.mxu0 %v648
        %1416 = vmatmul.f32.gmra.mxu0 %v512
        %v1417 = vpop.f32.mrf.mxu0
        %v1418 = vadd.f32 %v1398, %v1417
        %1419 = vdwg.mxu0
        %1420 = vmatpush.msra.mxu0 %v772
        %1421 = vmatpush.msra.mxu0 %v768
        %1422 = vmatpush.msra.mxu0 %v764
        %1423 = vmatpush.msra.mxu0 %v760
        %1424 = vmatpush.msra.mxu0 %v756
        %1425 = vmatpush.msra.mxu0 %v752
        %1426 = vmatpush.msra.mxu0 %v748
        %1427 = vmatpush.msra.mxu0 %v744
        %1428 = vmatpush.msra.mxu0 %v740
        %1429 = vmatpush.msra.mxu0 %v736
        %1430 = vmatpush.msra.mxu0 %v732
        %1431 = vmatpush.msra.mxu0 %v728
        %1432 = vmatpush.msra.mxu0 %v724
        %1433 = vmatpush.msra.mxu0 %v720
        %1434 = vmatpush.msra.mxu0 %v716
        %1435 = vmatpush.msra.mxu0 %v712
        %1436 = vmatmul.f32.gmra.mxu0 %v513
        %v1437 = vpop.f32.mrf.mxu0
        %v1438 = vadd.f32 %v1418, %v1437
        %1439 = vdwg.mxu0
        %1440 = vmatpush.msra.mxu0 %v836
        %1441 = vmatpush.msra.mxu0 %v832
        %1442 = vmatpush.msra.mxu0 %v828
        %1443 = vmatpush.msra.mxu0 %v824
        %1444 = vmatpush.msra.mxu0 %v820
        %1445 = vmatpush.msra.mxu0 %v816
        %1446 = vmatpush.msra.mxu0 %v812
        %1447 = vmatpush.msra.mxu0 %v808
        %1448 = vmatpush.msra.mxu0 %v804
        %1449 = vmatpush.msra.mxu0 %v800
        %1450 = vmatpush.msra.mxu0 %v796
        %1451 = vmatpush.msra.mxu0 %v792
        %1452 = vmatpush.msra.mxu0 %v788
        %1453 = vmatpush.msra.mxu0 %v784
        %1454 = vmatpush.msra.mxu0 %v780
        %1455 = vmatpush.msra.mxu0 %v776
        %1456 = vmatmul.f32.gmra.mxu0 %v514
        %v1457 = vpop.f32.mrf.mxu0
        %v1458 = vadd.f32 %v1438, %v1457
        %1459 = vdwg.mxu0
        %1460 = vmatpush.msra.mxu0 %v900
        %1461 = vmatpush.msra.mxu0 %v896
        %1462 = vmatpush.msra.mxu0 %v892
        %1463 = vmatpush.msra.mxu0 %v888
        %1464 = vmatpush.msra.mxu0 %v884
        %1465 = vmatpush.msra.mxu0 %v880
        %1466 = vmatpush.msra.mxu0 %v876
        %1467 = vmatpush.msra.mxu0 %v872
        %1468 = vmatpush.msra.mxu0 %v868
        %1469 = vmatpush.msra.mxu0 %v864
        %1470 = vmatpush.msra.mxu0 %v860
        %1471 = vmatpush.msra.mxu0 %v856
        %1472 = vmatpush.msra.mxu0 %v852
        %1473 = vmatpush.msra.mxu0 %v848
        %1474 = vmatpush.msra.mxu0 %v844
        %1475 = vmatpush.msra.mxu0 %v840
        %1476 = vmatmul.f32.gmra.mxu0 %v515
        %v1477 = vpop.f32.mrf.mxu0
        %v1478 = vadd.f32 %v1458, %v1477
        %1479 = vdwg.mxu0
        %1480 = vmatpush.msra.mxu0 %v964
        %1481 = vmatpush.msra.mxu0 %v960
        %1482 = vmatpush.msra.mxu0 %v956
        %1483 = vmatpush.msra.mxu0 %v952
        %1484 = vmatpush.msra.mxu0 %v948
        %1485 = vmatpush.msra.mxu0 %v944
        %1486 = vmatpush.msra.mxu0 %v940
        %1487 = vmatpush.msra.mxu0 %v936
        %1488 = vmatpush.msra.mxu0 %v932
        %1489 = vmatpush.msra.mxu0 %v928
        %1490 = vmatpush.msra.mxu0 %v924
        %1491 = vmatpush.msra.mxu0 %v920
        %1492 = vmatpush.msra.mxu0 %v916
        %1493 = vmatpush.msra.mxu0 %v912
        %1494 = vmatpush.msra.mxu0 %v908
        %1495 = vmatpush.msra.mxu0 %v904
        %1496 = vmatmul.f32.gmra.mxu0 %v516
        %v1497 = vpop.f32.mrf.mxu0
        %v1498 = vadd.f32 %v1478, %v1497
        %1499 = vdwg.mxu0
        %1500 = vmatpush.msra.mxu0 %v1028
        %1501 = vmatpush.msra.mxu0 %v1024
        %1502 = vmatpush.msra.mxu0 %v1020
        %1503 = vmatpush.msra.mxu0 %v1016
        %1504 = vmatpush.msra.mxu0 %v1012
        %1505 = vmatpush.msra.mxu0 %v1008
        %1506 = vmatpush.msra.mxu0 %v1004
        %1507 = vmatpush.msra.mxu0 %v1000
        %1508 = vmatpush.msra.mxu0 %v996
        %1509 = vmatpush.msra.mxu0 %v992
        %1510 = vmatpush.msra.mxu0 %v988
        %1511 = vmatpush.msra.mxu0 %v984
        %1512 = vmatpush.msra.mxu0 %v980
        %1513 = vmatpush.msra.mxu0 %v976
        %1514 = vmatpush.msra.mxu0 %v972
        %1515 = vmatpush.msra.mxu0 %v968
        %1516 = vmatmul.f32.gmra.mxu0 %v517
        %v1517 = vpop.f32.mrf.mxu0
        %v1518 = vadd.f32 %v1498, %v1517
        %1519 = vdwg.mxu0
        %1520 = vmatpush.msra.mxu0 %v581
        %1521 = vmatpush.msra.mxu0 %v577
        %1522 = vmatpush.msra.mxu0 %v573
        %1523 = vmatpush.msra.mxu0 %v569
        %1524 = vmatpush.msra.mxu0 %v565
        %1525 = vmatpush.msra.mxu0 %v561
        %1526 = vmatpush.msra.mxu0 %v557
        %1527 = vmatpush.msra.mxu0 %v553
        %1528 = vmatpush.msra.mxu0 %v549
        %1529 = vmatpush.msra.mxu0 %v545
        %1530 = vmatpush.msra.mxu0 %v541
        %1531 = vmatpush.msra.mxu0 %v537
        %1532 = vmatpush.msra.mxu0 %v533
        %1533 = vmatpush.msra.mxu0 %v529
        %1534 = vmatpush.msra.mxu0 %v525
        %1535 = vmatpush.msra.mxu0 %v521
        %1536 = vmatmul.f32.gmra.mxu0 %v510
        %v1537 = vpop.f32.mrf.mxu0
        %v1538 = vadd.f32 %v1035, %v1537
        %1539 = vdwg.mxu0
        %1540 = vmatpush.msra.mxu0 %v645
        %1541 = vmatpush.msra.mxu0 %v641
        %1542 = vmatpush.msra.mxu0 %v637
        %1543 = vmatpush.msra.mxu0 %v633
        %1544 = vmatpush.msra.mxu0 %v629
        %1545 = vmatpush.msra.mxu0 %v625
        %1546 = vmatpush.msra.mxu0 %v621
        %1547 = vmatpush.msra.mxu0 %v617
        %1548 = vmatpush.msra.mxu0 %v613
        %1549 = vmatpush.msra.mxu0 %v609
        %1550 = vmatpush.msra.mxu0 %v605
        %1551 = vmatpush.msra.mxu0 %v601
        %1552 = vmatpush.msra.mxu0 %v597
        %1553 = vmatpush.msra.mxu0 %v593
        %1554 = vmatpush.msra.mxu0 %v589
        %1555 = vmatpush.msra.mxu0 %v585
        %1556 = vmatmul.f32.gmra.mxu0 %v511
        %v1557 = vpop.f32.mrf.mxu0
        %v1558 = vadd.f32 %v1538, %v1557
        %1559 = vdwg.mxu0
        %1560 = vmatpush.msra.mxu0 %v709
        %1561 = vmatpush.msra.mxu0 %v705
        %1562 = vmatpush.msra.mxu0 %v701
        %1563 = vmatpush.msra.mxu0 %v697
        %1564 = vmatpush.msra.mxu0 %v693
        %1565 = vmatpush.msra.mxu0 %v689
        %1566 = vmatpush.msra.mxu0 %v685
        %1567 = vmatpush.msra.mxu0 %v681
        %1568 = vmatpush.msra.mxu0 %v677
        %1569 = vmatpush.msra.mxu0 %v673
        %1570 = vmatpush.msra.mxu0 %v669
        %1571 = vmatpush.msra.mxu0 %v665
        %1572 = vmatpush.msra.mxu0 %v661
        %1573 = vmatpush.msra.mxu0 %v657
        %1574 = vmatpush.msra.mxu0 %v653
        %1575 = vmatpush.msra.mxu0 %v649
        %1576 = vmatmul.f32.gmra.mxu0 %v512
        %v1577 = vpop.f32.mrf.mxu0
        %v1578 = vadd.f32 %v1558, %v1577
        %1579 = vdwg.mxu0
        %1580 = vmatpush.msra.mxu0 %v773
        %1581 = vmatpush.msra.mxu0 %v769
        %1582 = vmatpush.msra.mxu0 %v765
        %1583 = vmatpush.msra.mxu0 %v761
        %1584 = vmatpush.msra.mxu0 %v757
        %1585 = vmatpush.msra.mxu0 %v753
        %1586 = vmatpush.msra.mxu0 %v749
        %1587 = vmatpush.msra.mxu0 %v745
        %1588 = vmatpush.msra.mxu0 %v741
        %1589 = vmatpush.msra.mxu0 %v737
        %1590 = vmatpush.msra.mxu0 %v733
        %1591 = vmatpush.msra.mxu0 %v729
        %1592 = vmatpush.msra.mxu0 %v725
        %1593 = vmatpush.msra.mxu0 %v721
        %1594 = vmatpush.msra.mxu0 %v717
        %1595 = vmatpush.msra.mxu0 %v713
        %1596 = vmatmul.f32.gmra.mxu0 %v513
        %v1597 = vpop.f32.mrf.mxu0
        %v1598 = vadd.f32 %v1578, %v1597
        %1599 = vdwg.mxu0
        %1600 = vmatpush.msra.mxu0 %v837
        %1601 = vmatpush.msra.mxu0 %v833
        %1602 = vmatpush.msra.mxu0 %v829
        %1603 = vmatpush.msra.mxu0 %v825
        %1604 = vmatpush.msra.mxu0 %v821
        %1605 = vmatpush.msra.mxu0 %v817
        %1606 = vmatpush.msra.mxu0 %v813
        %1607 = vmatpush.msra.mxu0 %v809
        %1608 = vmatpush.msra.mxu0 %v805
        %1609 = vmatpush.msra.mxu0 %v801
        %1610 = vmatpush.msra.mxu0 %v797
        %1611 = vmatpush.msra.mxu0 %v793
        %1612 = vmatpush.msra.mxu0 %v789
        %1613 = vmatpush.msra.mxu0 %v785
        %1614 = vmatpush.msra.mxu0 %v781
        %1615 = vmatpush.msra.mxu0 %v777
        %1616 = vmatmul.f32.gmra.mxu0 %v514
        %v1617 = vpop.f32.mrf.mxu0
        %v1618 = vadd.f32 %v1598, %v1617
        %1619 = vdwg.mxu0
        %1620 = vmatpush.msra.mxu0 %v901
        %1621 = vmatpush.msra.mxu0 %v897
        %1622 = vmatpush.msra.mxu0 %v893
        %1623 = vmatpush.msra.mxu0 %v889
        %1624 = vmatpush.msra.mxu0 %v885
        %1625 = vmatpush.msra.mxu0 %v881
        %1626 = vmatpush.msra.mxu0 %v877
        %1627 = vmatpush.msra.mxu0 %v873
        %1628 = vmatpush.msra.mxu0 %v869
        %1629 = vmatpush.msra.mxu0 %v865
        %1630 = vmatpush.msra.mxu0 %v861
        %1631 = vmatpush.msra.mxu0 %v857
        %1632 = vmatpush.msra.mxu0 %v853
        %1633 = vmatpush.msra.mxu0 %v849
        %1634 = vmatpush.msra.mxu0 %v845
        %1635 = vmatpush.msra.mxu0 %v841
        %1636 = vmatmul.f32.gmra.mxu0 %v515
        %v1637 = vpop.f32.mrf.mxu0
        %v1638 = vadd.f32 %v1618, %v1637
        %1639 = vdwg.mxu0
        %1640 = vmatpush.msra.mxu0 %v965
        %1641 = vmatpush.msra.mxu0 %v961
        %1642 = vmatpush.msra.mxu0 %v957
        %1643 = vmatpush.msra.mxu0 %v953
        %1644 = vmatpush.msra.mxu0 %v949
        %1645 = vmatpush.msra.mxu0 %v945
        %1646 = vmatpush.msra.mxu0 %v941
        %1647 = vmatpush.msra.mxu0 %v937
        %1648 = vmatpush.msra.mxu0 %v933
        %1649 = vmatpush.msra.mxu0 %v929
        %1650 = vmatpush.msra.mxu0 %v925
        %1651 = vmatpush.msra.mxu0 %v921
        %1652 = vmatpush.msra.mxu0 %v917
        %1653 = vmatpush.msra.mxu0 %v913
        %1654 = vmatpush.msra.mxu0 %v909
        %1655 = vmatpush.msra.mxu0 %v905
        %1656 = vmatmul.f32.gmra.mxu0 %v516
        %v1657 = vpop.f32.mrf.mxu0
        %v1658 = vadd.f32 %v1638, %v1657
        %1659 = vdwg.mxu0
        %1660 = vmatpush.msra.mxu0 %v1029
        %1661 = vmatpush.msra.mxu0 %v1025
        %1662 = vmatpush.msra.mxu0 %v1021
        %1663 = vmatpush.msra.mxu0 %v1017
        %1664 = vmatpush.msra.mxu0 %v1013
        %1665 = vmatpush.msra.mxu0 %v1009
        %1666 = vmatpush.msra.mxu0 %v1005
        %1667 = vmatpush.msra.mxu0 %v1001
        %1668 = vmatpush.msra.mxu0 %v997
        %1669 = vmatpush.msra.mxu0 %v993
        %1670 = vmatpush.msra.mxu0 %v989
        %1671 = vmatpush.msra.mxu0 %v985
        %1672 = vmatpush.msra.mxu0 %v981
        %1673 = vmatpush.msra.mxu0 %v977
        %1674 = vmatpush.msra.mxu0 %v973
        %1675 = vmatpush.msra.mxu0 %v969
        %1676 = vmatmul.f32.gmra.mxu0 %v517
        %v1677 = vpop.f32.mrf.mxu0
        %v1678 = vadd.f32 %v1658, %v1677
        %1679 = vdwg.mxu0
        %v1680 = vmax.f32 %v1198, 0.0
        %v1681 = vmax.f32 %v1358, 0.0
        %v1682 = vmax.f32 %v1518, 0.0
        %v1683 = vmax.f32 %v1678, 0.0
        %v1684 = vld [vmem:[%s412] sm:$0xff]
        %v1685 = vld [vmem:[%s412 + $0x8] sm:$0xff]
        %v1686 = vld [vmem:[%s412 + $0x10] sm:$0xff]
        %v1687 = vld [vmem:[%s412 + $0x18] sm:$0xff]
        %v1688 = vld [vmem:[%s412 + $0x20] sm:$0xff]
        %v1689 = vld [vmem:[%s412 + $0x28] sm:$0xff]
        %v1690 = vld [vmem:[%s412 + $0x30] sm:$0xff]
        %v1691 = vld [vmem:[%s412 + $0x38] sm:$0xff]
        %v1692 = vld [vmem:[%s412 + $0x40] sm:$0xff]
        %v1693 = vld [vmem:[%s412 + $0x48] sm:$0xff]
        %v1694 = vld [vmem:[%s412 + $0x50] sm:$0xff]
        %v1695 = vld [vmem:[%s412 + $0x58] sm:$0xff]
        %v1696 = vld [vmem:[%s412 + $0x60] sm:$0xff]
        %v1697 = vld [vmem:[%s412 + $0x68] sm:$0xff]
        %v1698 = vld [vmem:[%s412 + $0x70] sm:$0xff]
        %v1699 = vld [vmem:[%s412 + $0x78] sm:$0xff]
        %v1700 = vld [vmem:[%s412 + $0x80] sm:$0xff]
        %v1701 = vld [vmem:[%s412 + $0x88] sm:$0xff]
        %v1702 = vld [vmem:[%s412 + $0x90] sm:$0xff]
        %v1703 = vld [vmem:[%s412 + $0x98] sm:$0xff]
        %v1704 = vld [vmem:[%s412 + $0xa0] sm:$0xff]
        %v1705 = vld [vmem:[%s412 + $0xa8] sm:$0xff]
        %v1706 = vld [vmem:[%s412 + $0xb0] sm:$0xff]
        %v1707 = vld [vmem:[%s412 + $0xb8] sm:$0xff]
        %v1708 = vld [vmem:[%s412 + $0xc0] sm:$0xff]
        %v1709 = vld [vmem:[%s412 + $0xc8] sm:$0xff]
        %v1710 = vld [vmem:[%s412 + $0xd0] sm:$0xff]
        %v1711 = vld [vmem:[%s412 + $0xd8] sm:$0xff]
        %v1712 = vld [vmem:[%s412 + $0xe0] sm:$0xff]
        %v1713 = vld [vmem:[%s412 + $0xe8] sm:$0xff]
        %v1714 = vld [vmem:[%s412 + $0xf0] sm:$0xff]
        %v1715 = vld [vmem:[%s412 + $0xf8] sm:$0xff]
        %v1716 = vld [vmem:[%s412 + $0x100] sm:$0xff]
        %v1717 = vld [vmem:[%s412 + $0x108] sm:$0xff]
        %v1718 = vld [vmem:[%s412 + $0x110] sm:$0xff]
        %v1719 = vld [vmem:[%s412 + $0x118] sm:$0xff]
        %v1720 = vld [vmem:[%s412 + $0x120] sm:$0xff]
        %v1721 = vld [vmem:[%s412 + $0x128] sm:$0xff]
        %v1722 = vld [vmem:[%s412 + $0x130] sm:$0xff]
        %v1723 = vld [vmem:[%s412 + $0x138] sm:$0xff]
        %v1724 = vld [vmem:[%s412 + $0x140] sm:$0xff]
        %v1725 = vld [vmem:[%s412 + $0x148] sm:$0xff]
        %v1726 = vld [vmem:[%s412 + $0x150] sm:$0xff]
        %v1727 = vld [vmem:[%s412 + $0x158] sm:$0xff]
        %v1728 = vld [vmem:[%s412 + $0x160] sm:$0xff]
        %v1729 = vld [vmem:[%s412 + $0x168] sm:$0xff]
        %v1730 = vld [vmem:[%s412 + $0x170] sm:$0xff]
        %v1731 = vld [vmem:[%s412 + $0x178] sm:$0xff]
        %v1732 = vld [vmem:[%s412 + $0x180] sm:$0xff]
        %v1733 = vld [vmem:[%s412 + $0x188] sm:$0xff]
        %v1734 = vld [vmem:[%s412 + $0x190] sm:$0xff]
        %v1735 = vld [vmem:[%s412 + $0x198] sm:$0xff]
        %v1736 = vld [vmem:[%s412 + $0x1a0] sm:$0xff]
        %v1737 = vld [vmem:[%s412 + $0x1a8] sm:$0xff]
        %v1738 = vld [vmem:[%s412 + $0x1b0] sm:$0xff]
        %v1739 = vld [vmem:[%s412 + $0x1b8] sm:$0xff]
        %v1740 = vld [vmem:[%s412 + $0x1c0] sm:$0xff]
        %v1741 = vld [vmem:[%s412 + $0x1c8] sm:$0xff]
        %v1742 = vld [vmem:[%s412 + $0x1d0] sm:$0xff]
        %v1743 = vld [vmem:[%s412 + $0x1d8] sm:$0xff]
        %v1744 = vld [vmem:[%s412 + $0x1e0] sm:$0xff]
        %v1745 = vld [vmem:[%s412 + $0x1e8] sm:$0xff]
        %v1746 = vld [vmem:[%s412 + $0x1f0] sm:$0xff]
        %v1747 = vld [vmem:[%s412 + $0x1f8] sm:$0xff]
        %v1748 = vld [vmem:[%s412 + $0x200] sm:$0xff]
        %v1749 = vld [vmem:[%s412 + $0x208] sm:$0xff]
        %v1750 = vld [vmem:[%s412 + $0x210] sm:$0xff]
        %v1751 = vld [vmem:[%s412 + $0x218] sm:$0xff]
        %v1752 = vld [vmem:[%s412 + $0x220] sm:$0xff]
        %v1753 = vld [vmem:[%s412 + $0x228] sm:$0xff]
        %v1754 = vld [vmem:[%s412 + $0x230] sm:$0xff]
        %v1755 = vld [vmem:[%s412 + $0x238] sm:$0xff]
        %v1756 = vld [vmem:[%s412 + $0x240] sm:$0xff]
        %v1757 = vld [vmem:[%s412 + $0x248] sm:$0xff]
        %v1758 = vld [vmem:[%s412 + $0x250] sm:$0xff]
        %v1759 = vld [vmem:[%s412 + $0x258] sm:$0xff]
        %v1760 = vld [vmem:[%s412 + $0x260] sm:$0xff]
        %v1761 = vld [vmem:[%s412 + $0x268] sm:$0xff]
        %v1762 = vld [vmem:[%s412 + $0x270] sm:$0xff]
        %v1763 = vld [vmem:[%s412 + $0x278] sm:$0xff]
        %v1764 = vld [vmem:[%s412 + $0x280] sm:$0xff]
        %v1765 = vld [vmem:[%s412 + $0x288] sm:$0xff]
        %v1766 = vld [vmem:[%s412 + $0x290] sm:$0xff]
        %v1767 = vld [vmem:[%s412 + $0x298] sm:$0xff]
        %v1768 = vld [vmem:[%s412 + $0x2a0] sm:$0xff]
        %v1769 = vld [vmem:[%s412 + $0x2a8] sm:$0xff]
        %v1770 = vld [vmem:[%s412 + $0x2b0] sm:$0xff]
        %v1771 = vld [vmem:[%s412 + $0x2b8] sm:$0xff]
        %v1772 = vld [vmem:[%s412 + $0x2c0] sm:$0xff]
        %v1773 = vld [vmem:[%s412 + $0x2c8] sm:$0xff]
        %v1774 = vld [vmem:[%s412 + $0x2d0] sm:$0xff]
        %v1775 = vld [vmem:[%s412 + $0x2d8] sm:$0xff]
        %v1776 = vld [vmem:[%s412 + $0x2e0] sm:$0xff]
        %v1777 = vld [vmem:[%s412 + $0x2e8] sm:$0xff]
        %v1778 = vld [vmem:[%s412 + $0x2f0] sm:$0xff]
        %v1779 = vld [vmem:[%s412 + $0x2f8] sm:$0xff]
        %v1780 = vld [vmem:[%s412 + $0x300] sm:$0xff]
        %v1781 = vld [vmem:[%s412 + $0x308] sm:$0xff]
        %v1782 = vld [vmem:[%s412 + $0x310] sm:$0xff]
        %v1783 = vld [vmem:[%s412 + $0x318] sm:$0xff]
        %v1784 = vld [vmem:[%s412 + $0x320] sm:$0xff]
        %v1785 = vld [vmem:[%s412 + $0x328] sm:$0xff]
        %v1786 = vld [vmem:[%s412 + $0x330] sm:$0xff]
        %v1787 = vld [vmem:[%s412 + $0x338] sm:$0xff]
        %v1788 = vld [vmem:[%s412 + $0x340] sm:$0xff]
        %v1789 = vld [vmem:[%s412 + $0x348] sm:$0xff]
        %v1790 = vld [vmem:[%s412 + $0x350] sm:$0xff]
        %v1791 = vld [vmem:[%s412 + $0x358] sm:$0xff]
        %v1792 = vld [vmem:[%s412 + $0x360] sm:$0xff]
        %v1793 = vld [vmem:[%s412 + $0x368] sm:$0xff]
        %v1794 = vld [vmem:[%s412 + $0x370] sm:$0xff]
        %v1795 = vld [vmem:[%s412 + $0x378] sm:$0xff]
        %v1796 = vld [vmem:[%s412 + $0x380] sm:$0xff]
        %v1797 = vld [vmem:[%s412 + $0x388] sm:$0xff]
        %v1798 = vld [vmem:[%s412 + $0x390] sm:$0xff]
        %v1799 = vld [vmem:[%s412 + $0x398] sm:$0xff]
        %v1800 = vld [vmem:[%s412 + $0x3a0] sm:$0xff]
        %v1801 = vld [vmem:[%s412 + $0x3a8] sm:$0xff]
        %v1802 = vld [vmem:[%s412 + $0x3b0] sm:$0xff]
        %v1803 = vld [vmem:[%s412 + $0x3b8] sm:$0xff]
        %v1804 = vld [vmem:[%s412 + $0x3c0] sm:$0xff]
        %v1805 = vld [vmem:[%s412 + $0x3c8] sm:$0xff]
        %v1806 = vld [vmem:[%s412 + $0x3d0] sm:$0xff]
        %v1807 = vld [vmem:[%s412 + $0x3d8] sm:$0xff]
        %v1808 = vld [vmem:[%s412 + $0x3e0] sm:$0xff]
        %v1809 = vld [vmem:[%s412 + $0x3e8] sm:$0xff]
        %v1810 = vld [vmem:[%s412 + $0x3f0] sm:$0xff]
        %v1811 = vld [vmem:[%s412 + $0x3f8] sm:$0xff]
        %v1812 = vld [vmem:[%s422] sm:$0x3]
        %v1814 = vperm.slane %v1812, 0
        %v1815 = vperm.slane %v1812, 1
        %1818 = vmatpush.msra.mxu0 %v1714
        %1819 = vmatpush.msra.mxu0 %v1712
        %1820 = vmatpush.msra.mxu0 %v1710
        %1821 = vmatpush.msra.mxu0 %v1708
        %1822 = vmatpush.msra.mxu0 %v1706
        %1823 = vmatpush.msra.mxu0 %v1704
        %1824 = vmatpush.msra.mxu0 %v1702
        %1825 = vmatpush.msra.mxu0 %v1700
        %1826 = vmatpush.msra.mxu0 %v1698
        %1827 = vmatpush.msra.mxu0 %v1696
        %1828 = vmatpush.msra.mxu0 %v1694
        %1829 = vmatpush.msra.mxu0 %v1692
        %1830 = vmatpush.msra.mxu0 %v1690
        %1831 = vmatpush.msra.mxu0 %v1688
        %1832 = vmatpush.msra.mxu0 %v1686
        %1833 = vmatpush.msra.mxu0 %v1684
        %1834 = vmatmul.f32.gmra.mxu0 %v1680
        %v1835 = vpop.f32.mrf.mxu0
        %v1836 = vadd.f32 %v1814, %v1835
        %1837 = vdwg.mxu0
        %1838 = vmatpush.msra.mxu0 %v1746
        %1839 = vmatpush.msra.mxu0 %v1744
        %1840 = vmatpush.msra.mxu0 %v1742
        %1841 = vmatpush.msra.mxu0 %v1740
        %1842 = vmatpush.msra.mxu0 %v1738
        %1843 = vmatpush.msra.mxu0 %v1736
        %1844 = vmatpush.msra.mxu0 %v1734
        %1845 = vmatpush.msra.mxu0 %v1732
        %1846 = vmatpush.msra.mxu0 %v1730
        %1847 = vmatpush.msra.mxu0 %v1728
        %1848 = vmatpush.msra.mxu0 %v1726
        %1849 = vmatpush.msra.mxu0 %v1724
        %1850 = vmatpush.msra.mxu0 %v1722
        %1851 = vmatpush.msra.mxu0 %v1720
        %1852 = vmatpush.msra.mxu0 %v1718
        %1853 = vmatpush.msra.mxu0 %v1716
        %1854 = vmatmul.f32.gmra.mxu0 %v1681
        %v1855 = vpop.f32.mrf.mxu0
        %v1856 = vadd.f32 %v1836, %v1855
        %1857 = vdwg.mxu0
        %1858 = vmatpush.msra.mxu0 %v1778
        %1859 = vmatpush.msra.mxu0 %v1776
        %1860 = vmatpush.msra.mxu0 %v1774
        %1861 = vmatpush.msra.mxu0 %v1772
        %1862 = vmatpush.msra.mxu0 %v1770
        %1863 = vmatpush.msra.mxu0 %v1768
        %1864 = vmatpush.msra.mxu0 %v1766
        %1865 = vmatpush.msra.mxu0 %v1764
        %1866 = vmatpush.msra.mxu0 %v1762
        %1867 = vmatpush.msra.mxu0 %v1760
        %1868 = vmatpush.msra.mxu0 %v1758
        %1869 = vmatpush.msra.mxu0 %v1756
        %1870 = vmatpush.msra.mxu0 %v1754
        %1871 = vmatpush.msra.mxu0 %v1752
        %1872 = vmatpush.msra.mxu0 %v1750
        %1873 = vmatpush.msra.mxu0 %v1748
        %1874 = vmatmul.f32.gmra.mxu0 %v1682
        %v1875 = vpop.f32.mrf.mxu0
        %v1876 = vadd.f32 %v1856, %v1875
        %1877 = vdwg.mxu0
        %1878 = vmatpush.msra.mxu0 %v1810
        %1879 = vmatpush.msra.mxu0 %v1808
        %1880 = vmatpush.msra.mxu0 %v1806
        %1881 = vmatpush.msra.mxu0 %v1804
        %1882 = vmatpush.msra.mxu0 %v1802
        %1883 = vmatpush.msra.mxu0 %v1800
        %1884 = vmatpush.msra.mxu0 %v1798
        %1885 = vmatpush.msra.mxu0 %v1796
        %1886 = vmatpush.msra.mxu0 %v1794
        %1887 = vmatpush.msra.mxu0 %v1792
        %1888 = vmatpush.msra.mxu0 %v1790
        %1889 = vmatpush.msra.mxu0 %v1788
        %1890 = vmatpush.msra.mxu0 %v1786
        %1891 = vmatpush.msra.mxu0 %v1784
        %1892 = vmatpush.msra.mxu0 %v1782
        %1893 = vmatpush.msra.mxu0 %v1780
        %1894 = vmatmul.f32.gmra.mxu0 %v1683
        %v1895 = vpop.f32.mrf.mxu0
        %v1896 = vadd.f32 %v1876, %v1895
        %1897 = vdwg.mxu0
        %1898 = vmatpush.msra.mxu0 %v1715
        %1899 = vmatpush.msra.mxu0 %v1713
        %1900 = vmatpush.msra.mxu0 %v1711
        %1901 = vmatpush.msra.mxu0 %v1709
        %1902 = vmatpush.msra.mxu0 %v1707
        %1903 = vmatpush.msra.mxu0 %v1705
        %1904 = vmatpush.msra.mxu0 %v1703
        %1905 = vmatpush.msra.mxu0 %v1701
        %1906 = vmatpush.msra.mxu0 %v1699
        %1907 = vmatpush.msra.mxu0 %v1697
        %1908 = vmatpush.msra.mxu0 %v1695
        %1909 = vmatpush.msra.mxu0 %v1693
        %1910 = vmatpush.msra.mxu0 %v1691
        %1911 = vmatpush.msra.mxu0 %v1689
        %1912 = vmatpush.msra.mxu0 %v1687
        %1913 = vmatpush.msra.mxu0 %v1685
        %1914 = vmatmul.f32.gmra.mxu0 %v1680
        %v1915 = vpop.f32.mrf.mxu0
        %v1916 = vadd.f32 %v1815, %v1915
        %1917 = vdwg.mxu0
        %1918 = vmatpush.msra.mxu0 %v1747
        %1919 = vmatpush.msra.mxu0 %v1745
        %1920 = vmatpush.msra.mxu0 %v1743
        %1921 = vmatpush.msra.mxu0 %v1741
        %1922 = vmatpush.msra.mxu0 %v1739
        %1923 = vmatpush.msra.mxu0 %v1737
        %1924 = vmatpush.msra.mxu0 %v1735
        %1925 = vmatpush.msra.mxu0 %v1733
        %1926 = vmatpush.msra.mxu0 %v1731
        %1927 = vmatpush.msra.mxu0 %v1729
        %1928 = vmatpush.msra.mxu0 %v1727
        %1929 = vmatpush.msra.mxu0 %v1725
        %1930 = vmatpush.msra.mxu0 %v1723
        %1931 = vmatpush.msra.mxu0 %v1721
        %1932 = vmatpush.msra.mxu0 %v1719
        %1933 = vmatpush.msra.mxu0 %v1717
        %1934 = vmatmul.f32.gmra.mxu0 %v1681
        %v1935 = vpop.f32.mrf.mxu0
        %v1936 = vadd.f32 %v1916, %v1935
        %1937 = vdwg.mxu0
        %1938 = vmatpush.msra.mxu0 %v1779
        %1939 = vmatpush.msra.mxu0 %v1777
        %1940 = vmatpush.msra.mxu0 %v1775
        %1941 = vmatpush.msra.mxu0 %v1773
        %1942 = vmatpush.msra.mxu0 %v1771
        %1943 = vmatpush.msra.mxu0 %v1769
        %1944 = vmatpush.msra.mxu0 %v1767
        %1945 = vmatpush.msra.mxu0 %v1765
        %1946 = vmatpush.msra.mxu0 %v1763
        %1947 = vmatpush.msra.mxu0 %v1761
        %1948 = vmatpush.msra.mxu0 %v1759
        %1949 = vmatpush.msra.mxu0 %v1757
        %1950 = vmatpush.msra.mxu0 %v1755
        %1951 = vmatpush.msra.mxu0 %v1753
        %1952 = vmatpush.msra.mxu0 %v1751
        %1953 = vmatpush.msra.mxu0 %v1749
        %1954 = vmatmul.f32.gmra.mxu0 %v1682
        %v1955 = vpop.f32.mrf.mxu0
        %v1956 = vadd.f32 %v1936, %v1955
        %1957 = vdwg.mxu0
        %1958 = vmatpush.msra.mxu0 %v1811
        %1959 = vmatpush.msra.mxu0 %v1809
        %1960 = vmatpush.msra.mxu0 %v1807
        %1961 = vmatpush.msra.mxu0 %v1805
        %1962 = vmatpush.msra.mxu0 %v1803
        %1963 = vmatpush.msra.mxu0 %v1801
        %1964 = vmatpush.msra.mxu0 %v1799
        %1965 = vmatpush.msra.mxu0 %v1797
        %1966 = vmatpush.msra.mxu0 %v1795
        %1967 = vmatpush.msra.mxu0 %v1793
        %1968 = vmatpush.msra.mxu0 %v1791
        %1969 = vmatpush.msra.mxu0 %v1789
        %1970 = vmatpush.msra.mxu0 %v1787
        %1971 = vmatpush.msra.mxu0 %v1785
        %1972 = vmatpush.msra.mxu0 %v1783
        %1973 = vmatpush.msra.mxu0 %v1781
        %1974 = vmatmul.f32.gmra.mxu0 %v1683
        %v1975 = vpop.f32.mrf.mxu0
        %v1976 = vadd.f32 %v1956, %v1975
        %1977 = vdwg.mxu0
        %v1978 = vmax.f32 %v1896, 0.0
        %v1979 = vmax.f32 %v1976, 0.0
        %v1980 = vld [vmem:[%s432] sm:$0xff]
        %v1981 = vld [vmem:[%s432 + $0x8] sm:$0xff]
        %v1982 = vld [vmem:[%s432 + $0x10] sm:$0xff]
        %v1983 = vld [vmem:[%s432 + $0x18] sm:$0xff]
        %v1984 = vld [vmem:[%s432 + $0x20] sm:$0xff]
        %v1985 = vld [vmem:[%s432 + $0x28] sm:$0xff]
        %v1986 = vld [vmem:[%s432 + $0x30] sm:$0xff]
        %v1987 = vld [vmem:[%s432 + $0x38] sm:$0xff]
        %v1988 = vld [vmem:[%s432 + $0x40] sm:$0xff]
        %v1989 = vld [vmem:[%s432 + $0x48] sm:$0xff]
        %v1990 = vld [vmem:[%s432 + $0x50] sm:$0xff]
        %v1991 = vld [vmem:[%s432 + $0x58] sm:$0xff]
        %v1992 = vld [vmem:[%s432 + $0x60] sm:$0xff]
        %v1993 = vld [vmem:[%s432 + $0x68] sm:$0xff]
        %v1994 = vld [vmem:[%s432 + $0x70] sm:$0xff]
        %v1995 = vld [vmem:[%s432 + $0x78] sm:$0xff]
        %v1996 = vld [vmem:[%s432 + $0x80] sm:$0xff]
        %v1997 = vld [vmem:[%s432 + $0x88] sm:$0xff]
        %v1998 = vld [vmem:[%s432 + $0x90] sm:$0xff]
        %v1999 = vld [vmem:[%s432 + $0x98] sm:$0xff]
        %v2000 = vld [vmem:[%s432 + $0xa0] sm:$0xff]
        %v2001 = vld [vmem:[%s432 + $0xa8] sm:$0xff]
        %v2002 = vld [vmem:[%s432 + $0xb0] sm:$0xff]
        %v2003 = vld [vmem:[%s432 + $0xb8] sm:$0xff]
        %v2004 = vld [vmem:[%s432 + $0xc0] sm:$0xff]
        %v2005 = vld [vmem:[%s432 + $0xc8] sm:$0xff]
        %v2006 = vld [vmem:[%s432 + $0xd0] sm:$0xff]
        %v2007 = vld [vmem:[%s432 + $0xd8] sm:$0xff]
        %v2008 = vld [vmem:[%s432 + $0xe0] sm:$0xff]
        %v2009 = vld [vmem:[%s432 + $0xe8] sm:$0xff]
        %v2010 = vld [vmem:[%s432 + $0xf0] sm:$0xff]
        %v2011 = vld [vmem:[%s432 + $0xf8] sm:$0xff]
        %v2012 = vld [vmem:[%s441] sm:$0x1]
        %v2014 = vperm.slane %v2012, 0
        %2016 = vmatpush.msra.mxu0 %v1995
        %2017 = vmatpush.msra.mxu0 %v1994
        %2018 = vmatpush.msra.mxu0 %v1993
        %2019 = vmatpush.msra.mxu0 %v1992
        %2020 = vmatpush.msra.mxu0 %v1991
        %2021 = vmatpush.msra.mxu0 %v1990
        %2022 = vmatpush.msra.mxu0 %v1989
        %2023 = vmatpush.msra.mxu0 %v1988
        %2024 = vmatpush.msra.mxu0 %v1987
        %2025 = vmatpush.msra.mxu0 %v1986
        %2026 = vmatpush.msra.mxu0 %v1985
        %2027 = vmatpush.msra.mxu0 %v1984
        %2028 = vmatpush.msra.mxu0 %v1983
        %2029 = vmatpush.msra.mxu0 %v1982
        %2030 = vmatpush.msra.mxu0 %v1981
        %2031 = vmatpush.msra.mxu0 %v1980
        %2032 = vmatmul.f32.gmra.mxu0 %v1978
        %v2033 = vpop.f32.mrf.mxu0
        %v2034 = vadd.f32 %v2014, %v2033
        %2035 = vdwg.mxu0
        %2036 = vmatpush.msra.mxu0 %v2011
        %2037 = vmatpush.msra.mxu0 %v2010
        %2038 = vmatpush.msra.mxu0 %v2009
        %2039 = vmatpush.msra.mxu0 %v2008
        %2040 = vmatpush.msra.mxu0 %v2007
        %2041 = vmatpush.msra.mxu0 %v2006
        %2042 = vmatpush.msra.mxu0 %v2005
        %2043 = vmatpush.msra.mxu0 %v2004
        %2044 = vmatpush.msra.mxu0 %v2003
        %2045 = vmatpush.msra.mxu0 %v2002
        %2046 = vmatpush.msra.mxu0 %v2001
        %2047 = vmatpush.msra.mxu0 %v2000
        %2048 = vmatpush.msra.mxu0 %v1999
        %2049 = vmatpush.msra.mxu0 %v1998
        %2050 = vmatpush.msra.mxu0 %v1997
        %2051 = vmatpush.msra.mxu0 %v1996
        %2052 = vmatmul.f32.gmra.mxu0 %v1979
        %v2053 = vpop.f32.mrf.mxu0
        %v2054 = vadd.f32 %v2034, %v2053
        %2055 = vdwg.mxu0
        %v2056 = vmax.f32 %v2054, 0.0
        %2057 = vst [vmem:[%s509] sm:$0xff] %v2056
        %p2058 = scmp.lt.s32.totalorder %s30, 3
        %s2059 = scalar_select %p2058, %s30, 3
        %s2060 = smul.addr %s2059, 8
        %s2061 = scalar_lea.vmem %s7, %s2060
        // Predicated region
        $region73: #{model_forward.1} parent=47 // pred_check
          %p2062 = pneg %p230
        $region74: #{model_forward.1} parent=47 // pred_check_branch
          %2064 = sbr.rel (%p2062) target = $region76
        $region75: #{model_forward.1} parent=47 // pred_region
          _
        $region76: #{model_forward.1} parent=47 // pred_fallthru
          _
      $region48: #{model_forward.1} parent=5 // pred_fallthru
        _
      %p2065 = scmp.le.s32.totalorder 2, %s25
      // Predicated region
      $region77: #{model_forward.1} parent=5 // pred_check
        %p2066 = pneg %p2065
      $region78: #{model_forward.1} parent=5 // pred_check_branch
        %2068 = sbr.rel (%p2066) target = $region80
      $region79: #{model_forward.1} parent=5 // pred_region
        %s2069 = ssub.s32 %s25, 2
        // Predicated region
        $region81: #{model_forward.1} parent=79 // pred_check
          %p2070 = pneg %p236
        $region82: #{model_forward.1} parent=79 // pred_check_branch
          %2072 = sbr.rel (%p2070) target = $region84
        $region83: #{model_forward.1} parent=79 // pred_region
          %p2073 = scmp.lt.s32.totalorder %s31, 3
          %s2074 = scalar_select %p2073, %s31, 3
          %s2075 = smul.addr %s2074, 8
          %s2076 = scalar_lea.vmem %s7, %s2075
        $region84: #{model_forward.1} parent=79 // pred_fallthru
          _
      $region80: #{model_forward.1} parent=5 // pred_fallthru
        _
    $region6: #{model_forward.1} parent=1 // loop_footer
      %s29 = sadd.s32 1, %s25
    $region7: #{model_forward.1} parent=1 // loop_footer_branch
      %24 = sbr.rel target = $region3
    $region8: #{model_forward.1} parent=1 // loop_exit
      _
    %2077 = vsyncpa [#allocation3], 1
    %s2078 = scalar_lea.sflag [#allocation3], 1
    %2079 = vsyncpa %s2078, 1
    %2080 = vsyncpa [#allocation5], 1
    %s2081 = scalar_lea.sflag [#allocation5], 1
    %2082 = vsyncpa %s2081, 1
    %2083 = vsyncpa [#allocation8], 1
    %s2084 = scalar_lea.sflag [#allocation8], 1
    %2085 = vsyncpa %s2084, 1
    %2086 = vsyncpa [#allocation11], 1
    %s2087 = scalar_lea.sflag [#allocation11], 1
    %2088 = vsyncpa %s2087, 1

</llo_original>
